<compile_context>
chip_gen: v7x
topology: tpu7x:2x2x1
jax: 0.10.0
libtpu: 0.0.40
codegen_flags: <defaults>
</compile_context>

<pallas_src>
import functools
import math

import jax
import jax.numpy as jnp
from jax import lax
from jax.experimental import pallas as pl
from jax.experimental.pallas import tpu as pltpu


def _linear_nt(x, w, b):
    """x @ w.T + b with w in PyTorch [out, in] layout (contract on the `in` axis)."""
    y = lax.dot_general(x, w, (((1,), (1,)), ((), ())),
                        preferred_element_type=jnp.float32)
    return y + b


def _mha_kernel(q_ref, k_ref, v_ref,
                wq_ref, bq_ref, wk_ref, bk_ref, wv_ref, bv_ref, wo_ref, bo_ref,
                out_ref, attn_ref, *, n_heads, d_head):
    """One batch element per grid step; all intermediates live in VMEM as f32."""
    q_in = q_ref[0].astype(jnp.float32)   # [S, D]
    k_in = k_ref[0].astype(jnp.float32)
    v_in = v_ref[0].astype(jnp.float32)

    # Input projections (MXU, f32 accumulate).
    q = _linear_nt(q_in, wq_ref[...], bq_ref[...])   # [S, D]
    k = _linear_nt(k_in, wk_ref[...], bk_ref[...])
    v = _linear_nt(v_in, wv_ref[...], bv_ref[...])

    scale = 1.0 / math.sqrt(d_head)

    # Static unroll over heads (n_heads is small); static lane slices, no reshapes.
    ctx_heads = []
    for hh in range(n_heads):
        sl = slice(hh * d_head, (hh + 1) * d_head)
        qh = q[:, sl]                                # [S, d]
        kh = k[:, sl]
        vh = v[:, sl]

        # scores[i, j] = <q_i, k_j> / sqrt(d)  -> [S, S]
        scores = lax.dot_general(qh, kh, (((1,), (1,)), ((), ())),
                                 preferred_element_type=jnp.float32) * scale

        # Numerically-stable softmax over keys (last dim), kept in f32.
        m = jnp.max(scores, axis=-1, keepdims=True)
        e = jnp.exp(scores - m)
        p = e / jnp.sum(e, axis=-1, keepdims=True)   # [S, S]

        # TODO(synk): nn.Dropout(p=0.1) on p_attn is train-only (stochastic);
        # eval-mode forward treats it as identity.
        attn_ref[0, hh] = p.astype(attn_ref.dtype)

        # snuffy quirk: x = p_attn.transpose(-2,-1) @ value
        # ctx[j, :] = sum_i p[i, j] * v[i, :]  (contract over the QUERY index i).
        ctx_h = lax.dot_general(p, vh, (((0,), (0,)), ((), ())),
                                preferred_element_type=jnp.float32)   # [S, d]
        ctx_heads.append(ctx_h)

    # Equivalent of x.transpose(1, 2).contiguous().view(B, S, h*d).
    ctx = jnp.concatenate(ctx_heads, axis=-1)            # [S, D]
    out = _linear_nt(ctx, wo_ref[...], bo_ref[...])      # output projection
    out_ref[0] = out.astype(out_ref.dtype)


def multi_headed_attention_forward(query, key, value, params, *, n_heads):
    """Pallas equivalent of MultiHeadedAttention.forward (eval mode).

    query/key/value: [B, S, d_model]
    params: dict of wq,bq,wk,bk,wv,bv,wo,bo with PyTorch nn.Linear layout
            (weights [d_model, d_model], biases [d_model]).
    returns (out [B, S, d_model], p_attn [B, n_heads, S, S])
    """
    b, s, d_model = query.shape
    assert d_model % n_heads == 0
    d_head = d_model // n_heads

    # Biases as [1, D] rows (broadcast on the VPU inside the kernel).
    bq = params["bq"].reshape(1, d_model)
    bk = params["bk"].reshape(1, d_model)
    bv = params["bv"].reshape(1, d_model)
    bo = params["bo"].reshape(1, d_model)

    kernel = functools.partial(_mha_kernel, n_heads=n_heads, d_head=d_head)

    seq_spec = pl.BlockSpec((1, s, d_model), lambda i: (i, 0, 0))
    w_spec = pl.BlockSpec((d_model, d_model), lambda i: (0, 0))    # resident across grid
    b_spec = pl.BlockSpec((1, d_model), lambda i: (0, 0))          # resident across grid

    out, attn = pl.pallas_call(
        kernel,
        out_shape=(
            jax.ShapeDtypeStruct((b, s, d_model), query.dtype),
            jax.ShapeDtypeStruct((b, n_heads, s, s), jnp.float32),
        ),
        grid=(b,),
        in_specs=[
            seq_spec, seq_spec, seq_spec,
            w_spec, b_spec,   # Wq, bq
            w_spec, b_spec,   # Wk, bk
            w_spec, b_spec,   # Wv, bv
            w_spec, b_spec,   # Wo, bo
        ],
        out_specs=(
            pl.BlockSpec((1, s, d_model), lambda i: (i, 0, 0)),
            pl.BlockSpec((1, n_heads, s, s), lambda i: (i, 0, 0, 0)),
        ),
        compiler_params=pltpu.CompilerParams(
            # Batch axis is independent -> shard across TensorCores (v7x megacore).
            dimension_semantics=("parallel",),
        ),
    )(query, key, value,
      params["wq"], bq, params["wk"], bk, params["wv"], bv, params["wo"], bo)

    return out, attn


def _reference(query, key, value, params, n_heads):
    """Plain-JAX transcription of the PyTorch forward (eval mode)."""
    b, s, d_model = query.shape
    d_head = d_model // n_heads

    def lin(x, w, bias):
        return x @ w.T + bias

    def split(x):
        return x.reshape(b, s, n_heads, d_head).transpose(0, 2, 1, 3)  # [B,h,S,d]

    q = split(lin(query, params["wq"], params["bq"]))
    k = split(lin(key, params["wk"], params["bk"]))
    v = split(lin(value, params["wv"], params["bv"]))

    scores = jnp.einsum("bhqd,bhkd->bhqk", q, k) / math.sqrt(d_head)
    p = jax.nn.softmax(scores, axis=-1)
    # snuffy: matmul(p_attn.transpose(-2,-1), value) -> contract over query index.
    x = jnp.einsum("bhqs,bhqd->bhsd", p, v)
    x = x.transpose(0, 2, 1, 3).reshape(b, s, d_model)
    out = lin(x, params["wo"], params["bo"])
    return out, p


if __name__ == "__main__":
    # Small shapes consistent with the module: batch=2, seq=8, d_model=32, heads=4.
    B, S, D, H = 2, 8, 32, 4

    root = jax.random.PRNGKey(0)
    keys = jax.random.split(root, 11)

    query = jax.random.normal(keys[0], (B, S, D), jnp.float32)
    key_in = jax.random.normal(keys[1], (B, S, D), jnp.float32)
    value = jax.random.normal(keys[2], (B, S, D), jnp.float32)

    # nn.Linear default init: U(-1/sqrt(in), 1/sqrt(in)).
    bound = 1.0 / math.sqrt(D)
    params = {
        "wq": jax.random.uniform(keys[3], (D, D), jnp.float32, -bound, bound),
        "bq": jax.random.uniform(keys[4], (D,), jnp.float32, -bound, bound),
        "wk": jax.random.uniform(keys[5], (D, D), jnp.float32, -bound, bound),
        "bk": jax.random.uniform(keys[6], (D,), jnp.float32, -bound, bound),
        "wv": jax.random.uniform(keys[7], (D, D), jnp.float32, -bound, bound),
        "bv": jax.random.uniform(keys[8], (D,), jnp.float32, -bound, bound),
        "wo": jax.random.uniform(keys[9], (D, D), jnp.float32, -bound, bound),
        "bo": jax.random.uniform(keys[10], (D,), jnp.float32, -bound, bound),
    }

    out, attn = multi_headed_attention_forward(query, key_in, value, params, n_heads=H)
    jax.block_until_ready((out, attn))

    ref_out, ref_attn = _reference(query, key_in, value, params, H)

    assert out.shape == (B, S, D)
    assert attn.shape == (B, H, S, S)
    assert jnp.allclose(out, ref_out, atol=1e-5, rtol=1e-5)
    assert jnp.allclose(attn, ref_attn, atol=1e-5, rtol=1e-5)

    print("KERNEL_OK")
</pallas_src>

<mosaic_0001>
module attributes {stable_mosaic.version = 11 : i64} {
  func.func @_mha_kernel(%arg0: i32, %arg1: memref<1x8x32xf32, #tpu.memory_space<vmem>>, %arg2: memref<1x8x32xf32, #tpu.memory_space<vmem>>, %arg3: memref<1x8x32xf32, #tpu.memory_space<vmem>>, %arg4: memref<32x32xf32, #tpu.memory_space<vmem>>, %arg5: memref<1x32xf32, #tpu.memory_space<vmem>>, %arg6: memref<32x32xf32, #tpu.memory_space<vmem>>, %arg7: memref<1x32xf32, #tpu.memory_space<vmem>>, %arg8: memref<32x32xf32, #tpu.memory_space<vmem>>, %arg9: memref<1x32xf32, #tpu.memory_space<vmem>>, %arg10: memref<32x32xf32, #tpu.memory_space<vmem>>, %arg11: memref<1x32xf32, #tpu.memory_space<vmem>>, %arg12: memref<1x8x32xf32, #tpu.memory_space<vmem>>, %arg13: memref<1x4x8x8xf32, #tpu.memory_space<vmem>>) attributes {dimension_semantics = [#tpu.dimension_semantics<parallel>], iteration_bounds = array<i64: 2>, scalar_prefetch = 0 : i64, scratch_operands = 0 : i64, tpu.core_type = #tpu.core_type<tc>, window_params = [{transform_indices = @transform_0, window_bounds = array<i64: 1, 8, 32>}, {transform_indices = @transform_1, window_bounds = array<i64: 1, 8, 32>}, {transform_indices = @transform_2, window_bounds = array<i64: 1, 8, 32>}, {pipeline_mode = #tpu.pipeline_mode<synchronous>, transform_indices = @transform_3, window_bounds = array<i64: 32, 32>}, {pipeline_mode = #tpu.pipeline_mode<synchronous>, transform_indices = @transform_4, window_bounds = array<i64: 1, 32>}, {pipeline_mode = #tpu.pipeline_mode<synchronous>, transform_indices = @transform_5, window_bounds = array<i64: 32, 32>}, {pipeline_mode = #tpu.pipeline_mode<synchronous>, transform_indices = @transform_6, window_bounds = array<i64: 1, 32>}, {pipeline_mode = #tpu.pipeline_mode<synchronous>, transform_indices = @transform_7, window_bounds = array<i64: 32, 32>}, {pipeline_mode = #tpu.pipeline_mode<synchronous>, transform_indices = @transform_8, window_bounds = array<i64: 1, 32>}, {pipeline_mode = #tpu.pipeline_mode<synchronous>, transform_indices = @transform_9, window_bounds = array<i64: 32, 32>}, {pipeline_mode = #tpu.pipeline_mode<synchronous>, transform_indices = @transform_10, window_bounds = array<i64: 1, 32>}, {transform_indices = @transform_11, window_bounds = array<i64: 1, 8, 32>}, {transform_indices = @transform_12, window_bounds = array<i64: 1, 4, 8, 8>}]} {
    %c0 = arith.constant 0 : index
    %c0_0 = arith.constant 0 : index
    %c0_1 = arith.constant 0 : index
    %0 = vector.load %arg1[%c0, %c0_0, %c0_1] : memref<1x8x32xf32, #tpu.memory_space<vmem>>, vector<1x8x32xf32>
    %1 = vector.shape_cast %0 : vector<1x8x32xf32> to vector<8x32xf32>
    %c0_2 = arith.constant 0 : index
    %c0_3 = arith.constant 0 : index
    %c0_4 = arith.constant 0 : index
    %2 = vector.load %arg2[%c0_2, %c0_3, %c0_4] : memref<1x8x32xf32, #tpu.memory_space<vmem>>, vector<1x8x32xf32>
    %3 = vector.shape_cast %2 : vector<1x8x32xf32> to vector<8x32xf32>
    %c0_5 = arith.constant 0 : index
    %c0_6 = arith.constant 0 : index
    %c0_7 = arith.constant 0 : index
    %4 = vector.load %arg3[%c0_5, %c0_6, %c0_7] : memref<1x8x32xf32, #tpu.memory_space<vmem>>, vector<1x8x32xf32>
    %5 = vector.shape_cast %4 : vector<1x8x32xf32> to vector<8x32xf32>
    %c0_8 = arith.constant 0 : index
    %c0_9 = arith.constant 0 : index
    %6 = vector.load %arg4[%c0_8, %c0_9] : memref<32x32xf32, #tpu.memory_space<vmem>>, vector<32x32xf32>
    %c0_10 = arith.constant 0 : index
    %c0_11 = arith.constant 0 : index
    %7 = vector.load %arg5[%c0_10, %c0_11] : memref<1x32xf32, #tpu.memory_space<vmem>>, vector<1x32xf32>
    %cst = arith.constant dense<0.000000e+00> : vector<8x32xf32>
    %8 = tpu.matmul %1, %6, %cst {dimension_numbers = #tpu.dot_dimension_numbers<[1], [1], [0], [0], [0, 0, 1, 0], [], []>} : vector<8x32xf32>, vector<32x32xf32>, vector<8x32xf32> -> vector<8x32xf32>
    %9 = vector.broadcast %7 : vector<1x32xf32> to vector<8x32xf32>
    %10 = arith.addf %8, %9 : vector<8x32xf32>
    %c0_12 = arith.constant 0 : index
    %c0_13 = arith.constant 0 : index
    %11 = vector.load %arg6[%c0_12, %c0_13] : memref<32x32xf32, #tpu.memory_space<vmem>>, vector<32x32xf32>
    %c0_14 = arith.constant 0 : index
    %c0_15 = arith.constant 0 : index
    %12 = vector.load %arg7[%c0_14, %c0_15] : memref<1x32xf32, #tpu.memory_space<vmem>>, vector<1x32xf32>
    %cst_16 = arith.constant dense<0.000000e+00> : vector<8x32xf32>
    %13 = tpu.matmul %3, %11, %cst_16 {dimension_numbers = #tpu.dot_dimension_numbers<[1], [1], [0], [0], [0, 0, 1, 0], [], []>} : vector<8x32xf32>, vector<32x32xf32>, vector<8x32xf32> -> vector<8x32xf32>
    %14 = vector.broadcast %12 : vector<1x32xf32> to vector<8x32xf32>
    %15 = arith.addf %13, %14 : vector<8x32xf32>
    %c0_17 = arith.constant 0 : index
    %c0_18 = arith.constant 0 : index
    %16 = vector.load %arg8[%c0_17, %c0_18] : memref<32x32xf32, #tpu.memory_space<vmem>>, vector<32x32xf32>
    %c0_19 = arith.constant 0 : index
    %c0_20 = arith.constant 0 : index
    %17 = vector.load %arg9[%c0_19, %c0_20] : memref<1x32xf32, #tpu.memory_space<vmem>>, vector<1x32xf32>
    %cst_21 = arith.constant dense<0.000000e+00> : vector<8x32xf32>
    %18 = tpu.matmul %5, %16, %cst_21 {dimension_numbers = #tpu.dot_dimension_numbers<[1], [1], [0], [0], [0, 0, 1, 0], [], []>} : vector<8x32xf32>, vector<32x32xf32>, vector<8x32xf32> -> vector<8x32xf32>
    %19 = vector.broadcast %17 : vector<1x32xf32> to vector<8x32xf32>
    %20 = arith.addf %18, %19 : vector<8x32xf32>
    %21 = vector.extract_strided_slice %10 {offsets = [0, 0], sizes = [8, 8], strides = [1, 1]} : vector<8x32xf32> to vector<8x8xf32>
    %22 = vector.extract_strided_slice %15 {offsets = [0, 0], sizes = [8, 8], strides = [1, 1]} : vector<8x32xf32> to vector<8x8xf32>
    %23 = vector.extract_strided_slice %20 {offsets = [0, 0], sizes = [8, 8], strides = [1, 1]} : vector<8x32xf32> to vector<8x8xf32>
    %cst_22 = arith.constant dense<0.000000e+00> : vector<8x8xf32>
    %24 = tpu.matmul %21, %22, %cst_22 {dimension_numbers = #tpu.dot_dimension_numbers<[1], [1], [0], [0], [0, 0, 1, 0], [], []>} : vector<8x8xf32>, vector<8x8xf32>, vector<8x8xf32> -> vector<8x8xf32>
    %cst_23 = arith.constant 0.353553385 : f32
    %25 = vector.broadcast %cst_23 : f32 to vector<8x8xf32>
    %26 = arith.mulf %24, %25 : vector<8x8xf32>
    %cst_24 = arith.constant dense<0xFF800000> : vector<8xf32>
    %27 = vector.multi_reduction <maximumf>, %26, %cst_24 [1] : vector<8x8xf32> to vector<8xf32>
    %28 = vector.shape_cast %27 : vector<8xf32> to vector<8x1xf32>
    %29 = vector.broadcast %28 : vector<8x1xf32> to vector<8x8xf32>
    %30 = arith.subf %26, %29 : vector<8x8xf32>
    %31 = math.exp %30 : vector<8x8xf32>
    %cst_25 = arith.constant dense<0.000000e+00> : vector<8xf32>
    %32 = vector.multi_reduction <add>, %31, %cst_25 [1] : vector<8x8xf32> to vector<8xf32>
    %33 = vector.shape_cast %32 : vector<8xf32> to vector<8x1xf32>
    %34 = vector.broadcast %33 : vector<8x1xf32> to vector<8x8xf32>
    %35 = arith.divf %31, %34 : vector<8x8xf32>
    %c0_26 = arith.constant 0 : index
    %c0_27 = arith.constant 0 : index
    %c0_28 = arith.constant 0 : index
    %c0_29 = arith.constant 0 : index
    %36 = vector.load %arg13[%c0_26, %c0_27, %c0_28, %c0_29] : memref<1x4x8x8xf32, #tpu.memory_space<vmem>>, vector<1x1x8x8xf32>
    %37 = vector.shape_cast %36 : vector<1x1x8x8xf32> to vector<8x8xf32>
    %38 = vector.shape_cast %35 : vector<8x8xf32> to vector<1x1x8x8xf32>
    tpu.vector_store %arg13[%c0_26, %c0_27, %c0_28, %c0_29], %38 {strides = array<i32>} : memref<1x4x8x8xf32, #tpu.memory_space<vmem>>, vector<1x1x8x8xf32>,
    %cst_30 = arith.constant dense<0.000000e+00> : vector<8x8xf32>
    %39 = tpu.matmul %35, %23, %cst_30 {dimension_numbers = #tpu.dot_dimension_numbers<[0], [0], [1], [1], [0, 1, 1, 1], [], []>} : vector<8x8xf32>, vector<8x8xf32>, vector<8x8xf32> -> vector<8x8xf32>
    %40 = vector.extract_strided_slice %10 {offsets = [0, 8], sizes = [8, 8], strides = [1, 1]} : vector<8x32xf32> to vector<8x8xf32>
    %41 = vector.extract_strided_slice %15 {offsets = [0, 8], sizes = [8, 8], strides = [1, 1]} : vector<8x32xf32> to vector<8x8xf32>
    %42 = vector.extract_strided_slice %20 {offsets = [0, 8], sizes = [8, 8], strides = [1, 1]} : vector<8x32xf32> to vector<8x8xf32>
    %cst_31 = arith.constant dense<0.000000e+00> : vector<8x8xf32>
    %43 = tpu.matmul %40, %41, %cst_31 {dimension_numbers = #tpu.dot_dimension_numbers<[1], [1], [0], [0], [0, 0, 1, 0], [], []>} : vector<8x8xf32>, vector<8x8xf32>, vector<8x8xf32> -> vector<8x8xf32>
    %cst_32 = arith.constant 0.353553385 : f32
    %44 = vector.broadcast %cst_32 : f32 to vector<8x8xf32>
    %45 = arith.mulf %43, %44 : vector<8x8xf32>
    %cst_33 = arith.constant dense<0xFF800000> : vector<8xf32>
    %46 = vector.multi_reduction <maximumf>, %45, %cst_33 [1] : vector<8x8xf32> to vector<8xf32>
    %47 = vector.shape_cast %46 : vector<8xf32> to vector<8x1xf32>
    %48 = vector.broadcast %47 : vector<8x1xf32> to vector<8x8xf32>
    %49 = arith.subf %45, %48 : vector<8x8xf32>
    %50 = math.exp %49 : vector<8x8xf32>
    %cst_34 = arith.constant dense<0.000000e+00> : vector<8xf32>
    %51 = vector.multi_reduction <add>, %50, %cst_34 [1] : vector<8x8xf32> to vector<8xf32>
    %52 = vector.shape_cast %51 : vector<8xf32> to vector<8x1xf32>
    %53 = vector.broadcast %52 : vector<8x1xf32> to vector<8x8xf32>
    %54 = arith.divf %50, %53 : vector<8x8xf32>
    %c0_35 = arith.constant 0 : index
    %c1 = arith.constant 1 : index
    %c0_36 = arith.constant 0 : index
    %c0_37 = arith.constant 0 : index
    %55 = vector.load %arg13[%c0_35, %c1, %c0_36, %c0_37] : memref<1x4x8x8xf32, #tpu.memory_space<vmem>>, vector<1x1x8x8xf32>
    %56 = vector.shape_cast %55 : vector<1x1x8x8xf32> to vector<8x8xf32>
    %57 = vector.shape_cast %54 : vector<8x8xf32> to vector<1x1x8x8xf32>
    tpu.vector_store %arg13[%c0_35, %c1, %c0_36, %c0_37], %57 {strides = array<i32>} : memref<1x4x8x8xf32, #tpu.memory_space<vmem>>, vector<1x1x8x8xf32>,
    %cst_38 = arith.constant dense<0.000000e+00> : vector<8x8xf32>
    %58 = tpu.matmul %54, %42, %cst_38 {dimension_numbers = #tpu.dot_dimension_numbers<[0], [0], [1], [1], [0, 1, 1, 1], [], []>} : vector<8x8xf32>, vector<8x8xf32>, vector<8x8xf32> -> vector<8x8xf32>
    %59 = vector.extract_strided_slice %10 {offsets = [0, 16], sizes = [8, 8], strides = [1, 1]} : vector<8x32xf32> to vector<8x8xf32>
    %60 = vector.extract_strided_slice %15 {offsets = [0, 16], sizes = [8, 8], strides = [1, 1]} : vector<8x32xf32> to vector<8x8xf32>
    %61 = vector.extract_strided_slice %20 {offsets = [0, 16], sizes = [8, 8], strides = [1, 1]} : vector<8x32xf32> to vector<8x8xf32>
    %cst_39 = arith.constant dense<0.000000e+00> : vector<8x8xf32>
    %62 = tpu.matmul %59, %60, %cst_39 {dimension_numbers = #tpu.dot_dimension_numbers<[1], [1], [0], [0], [0, 0, 1, 0], [], []>} : vector<8x8xf32>, vector<8x8xf32>, vector<8x8xf32> -> vector<8x8xf32>
    %cst_40 = arith.constant 0.353553385 : f32
    %63 = vector.broadcast %cst_40 : f32 to vector<8x8xf32>
    %64 = arith.mulf %62, %63 : vector<8x8xf32>
    %cst_41 = arith.constant dense<0xFF800000> : vector<8xf32>
    %65 = vector.multi_reduction <maximumf>, %64, %cst_41 [1] : vector<8x8xf32> to vector<8xf32>
    %66 = vector.shape_cast %65 : vector<8xf32> to vector<8x1xf32>
    %67 = vector.broadcast %66 : vector<8x1xf32> to vector<8x8xf32>
    %68 = arith.subf %64, %67 : vector<8x8xf32>
    %69 = math.exp %68 : vector<8x8xf32>
    %cst_42 = arith.constant dense<0.000000e+00> : vector<8xf32>
    %70 = vector.multi_reduction <add>, %69, %cst_42 [1] : vector<8x8xf32> to vector<8xf32>
    %71 = vector.shape_cast %70 : vector<8xf32> to vector<8x1xf32>
    %72 = vector.broadcast %71 : vector<8x1xf32> to vector<8x8xf32>
    %73 = arith.divf %69, %72 : vector<8x8xf32>
    %c0_43 = arith.constant 0 : index
    %c2 = arith.constant 2 : index
    %c0_44 = arith.constant 0 : index
    %c0_45 = arith.constant 0 : index
    %74 = vector.load %arg13[%c0_43, %c2, %c0_44, %c0_45] : memref<1x4x8x8xf32, #tpu.memory_space<vmem>>, vector<1x1x8x8xf32>
    %75 = vector.shape_cast %74 : vector<1x1x8x8xf32> to vector<8x8xf32>
    %76 = vector.shape_cast %73 : vector<8x8xf32> to vector<1x1x8x8xf32>
    tpu.vector_store %arg13[%c0_43, %c2, %c0_44, %c0_45], %76 {strides = array<i32>} : memref<1x4x8x8xf32, #tpu.memory_space<vmem>>, vector<1x1x8x8xf32>,
    %cst_46 = arith.constant dense<0.000000e+00> : vector<8x8xf32>
    %77 = tpu.matmul %73, %61, %cst_46 {dimension_numbers = #tpu.dot_dimension_numbers<[0], [0], [1], [1], [0, 1, 1, 1], [], []>} : vector<8x8xf32>, vector<8x8xf32>, vector<8x8xf32> -> vector<8x8xf32>
    %78 = vector.extract_strided_slice %10 {offsets = [0, 24], sizes = [8, 8], strides = [1, 1]} : vector<8x32xf32> to vector<8x8xf32>
    %79 = vector.extract_strided_slice %15 {offsets = [0, 24], sizes = [8, 8], strides = [1, 1]} : vector<8x32xf32> to vector<8x8xf32>
    %80 = vector.extract_strided_slice %20 {offsets = [0, 24], sizes = [8, 8], strides = [1, 1]} : vector<8x32xf32> to vector<8x8xf32>
    %cst_47 = arith.constant dense<0.000000e+00> : vector<8x8xf32>
    %81 = tpu.matmul %78, %79, %cst_47 {dimension_numbers = #tpu.dot_dimension_numbers<[1], [1], [0], [0], [0, 0, 1, 0], [], []>} : vector<8x8xf32>, vector<8x8xf32>, vector<8x8xf32> -> vector<8x8xf32>
    %cst_48 = arith.constant 0.353553385 : f32
    %82 = vector.broadcast %cst_48 : f32 to vector<8x8xf32>
    %83 = arith.mulf %81, %82 : vector<8x8xf32>
    %cst_49 = arith.constant dense<0xFF800000> : vector<8xf32>
    %84 = vector.multi_reduction <maximumf>, %83, %cst_49 [1] : vector<8x8xf32> to vector<8xf32>
    %85 = vector.shape_cast %84 : vector<8xf32> to vector<8x1xf32>
    %86 = vector.broadcast %85 : vector<8x1xf32> to vector<8x8xf32>
    %87 = arith.subf %83, %86 : vector<8x8xf32>
    %88 = math.exp %87 : vector<8x8xf32>
    %cst_50 = arith.constant dense<0.000000e+00> : vector<8xf32>
    %89 = vector.multi_reduction <add>, %88, %cst_50 [1] : vector<8x8xf32> to vector<8xf32>
    %90 = vector.shape_cast %89 : vector<8xf32> to vector<8x1xf32>
    %91 = vector.broadcast %90 : vector<8x1xf32> to vector<8x8xf32>
    %92 = arith.divf %88, %91 : vector<8x8xf32>
    %c0_51 = arith.constant 0 : index
    %c3 = arith.constant 3 : index
    %c0_52 = arith.constant 0 : index
    %c0_53 = arith.constant 0 : index
    %93 = vector.load %arg13[%c0_51, %c3, %c0_52, %c0_53] : memref<1x4x8x8xf32, #tpu.memory_space<vmem>>, vector<1x1x8x8xf32>
    %94 = vector.shape_cast %93 : vector<1x1x8x8xf32> to vector<8x8xf32>
    %95 = vector.shape_cast %92 : vector<8x8xf32> to vector<1x1x8x8xf32>
    tpu.vector_store %arg13[%c0_51, %c3, %c0_52, %c0_53], %95 {strides = array<i32>} : memref<1x4x8x8xf32, #tpu.memory_space<vmem>>, vector<1x1x8x8xf32>,
    %cst_54 = arith.constant dense<0.000000e+00> : vector<8x8xf32>
    %96 = tpu.matmul %92, %80, %cst_54 {dimension_numbers = #tpu.dot_dimension_numbers<[0], [0], [1], [1], [0, 1, 1, 1], [], []>} : vector<8x8xf32>, vector<8x8xf32>, vector<8x8xf32> -> vector<8x8xf32>
    %97 = tpu.concatenate %39, %58, %77, %96 in 1 : vector<8x8xf32>, vector<8x8xf32>, vector<8x8xf32>, vector<8x8xf32> -> vector<8x32xf32>
    %c0_55 = arith.constant 0 : index
    %c0_56 = arith.constant 0 : index
    %98 = vector.load %arg10[%c0_55, %c0_56] : memref<32x32xf32, #tpu.memory_space<vmem>>, vector<32x32xf32>
    %c0_57 = arith.constant 0 : index
    %c0_58 = arith.constant 0 : index
    %99 = vector.load %arg11[%c0_57, %c0_58] : memref<1x32xf32, #tpu.memory_space<vmem>>, vector<1x32xf32>
    %cst_59 = arith.constant dense<0.000000e+00> : vector<8x32xf32>
    %100 = tpu.matmul %97, %98, %cst_59 {dimension_numbers = #tpu.dot_dimension_numbers<[1], [1], [0], [0], [0, 0, 1, 0], [], []>} : vector<8x32xf32>, vector<32x32xf32>, vector<8x32xf32> -> vector<8x32xf32>
    %101 = vector.broadcast %99 : vector<1x32xf32> to vector<8x32xf32>
    %102 = arith.addf %100, %101 : vector<8x32xf32>
    %c0_60 = arith.constant 0 : index
    %c0_61 = arith.constant 0 : index
    %c0_62 = arith.constant 0 : index
    %103 = vector.load %arg12[%c0_60, %c0_61, %c0_62] : memref<1x8x32xf32, #tpu.memory_space<vmem>>, vector<1x8x32xf32>
    %104 = vector.shape_cast %103 : vector<1x8x32xf32> to vector<8x32xf32>
    %105 = vector.shape_cast %102 : vector<8x32xf32> to vector<1x8x32xf32>
    tpu.vector_store %arg12[%c0_60, %c0_61, %c0_62], %105 {strides = array<i32>} : memref<1x8x32xf32, #tpu.memory_space<vmem>>, vector<1x8x32xf32>,
    return
  }
  func.func @transform_0(%arg0: i32) -> (i32, i32, i32) {
    %c0_i32 = arith.constant 0 : i32
    %c0_i32_0 = arith.constant 0 : i32
    %c0_i32_1 = arith.constant 0 : i32
    return %arg0, %c0_i32, %c0_i32_0 : i32, i32, i32
  }
  func.func @transform_1(%arg0: i32) -> (i32, i32, i32) {
    %c0_i32 = arith.constant 0 : i32
    %c0_i32_0 = arith.constant 0 : i32
    %c0_i32_1 = arith.constant 0 : i32
    return %arg0, %c0_i32, %c0_i32_0 : i32, i32, i32
  }
  func.func @transform_2(%arg0: i32) -> (i32, i32, i32) {
    %c0_i32 = arith.constant 0 : i32
    %c0_i32_0 = arith.constant 0 : i32
    %c0_i32_1 = arith.constant 0 : i32
    return %arg0, %c0_i32, %c0_i32_0 : i32, i32, i32
  }
  func.func @transform_3(%arg0: i32) -> (i32, i32) {
    %c0_i32 = arith.constant 0 : i32
    %c0_i32_0 = arith.constant 0 : i32
    %c0_i32_1 = arith.constant 0 : i32
    return %c0_i32, %c0_i32_0 : i32, i32
  }
  func.func @transform_4(%arg0: i32) -> (i32, i32) {
    %c0_i32 = arith.constant 0 : i32
    %c0_i32_0 = arith.constant 0 : i32
    %c0_i32_1 = arith.constant 0 : i32
    return %c0_i32, %c0_i32_0 : i32, i32
  }
  func.func @transform_5(%arg0: i32) -> (i32, i32) {
    %c0_i32 = arith.constant 0 : i32
    %c0_i32_0 = arith.constant 0 : i32
    %c0_i32_1 = arith.constant 0 : i32
    return %c0_i32, %c0_i32_0 : i32, i32
  }
  func.func @transform_6(%arg0: i32) -> (i32, i32) {
    %c0_i32 = arith.constant 0 : i32
    %c0_i32_0 = arith.constant 0 : i32
    %c0_i32_1 = arith.constant 0 : i32
    return %c0_i32, %c0_i32_0 : i32, i32
  }
  func.func @transform_7(%arg0: i32) -> (i32, i32) {
    %c0_i32 = arith.constant 0 : i32
    %c0_i32_0 = arith.constant 0 : i32
    %c0_i32_1 = arith.constant 0 : i32
    return %c0_i32, %c0_i32_0 : i32, i32
  }
  func.func @transform_8(%arg0: i32) -> (i32, i32) {
    %c0_i32 = arith.constant 0 : i32
    %c0_i32_0 = arith.constant 0 : i32
    %c0_i32_1 = arith.constant 0 : i32
    return %c0_i32, %c0_i32_0 : i32, i32
  }
  func.func @transform_9(%arg0: i32) -> (i32, i32) {
    %c0_i32 = arith.constant 0 : i32
    %c0_i32_0 = arith.constant 0 : i32
    %c0_i32_1 = arith.constant 0 : i32
    return %c0_i32, %c0_i32_0 : i32, i32
  }
  func.func @transform_10(%arg0: i32) -> (i32, i32) {
    %c0_i32 = arith.constant 0 : i32
    %c0_i32_0 = arith.constant 0 : i32
    %c0_i32_1 = arith.constant 0 : i32
    return %c0_i32, %c0_i32_0 : i32, i32
  }
  func.func @transform_11(%arg0: i32) -> (i32, i32, i32) {
    %c0_i32 = arith.constant 0 : i32
    %c0_i32_0 = arith.constant 0 : i32
    %c0_i32_1 = arith.constant 0 : i32
    return %arg0, %c0_i32, %c0_i32_0 : i32, i32, i32
  }
  func.func @transform_12(%arg0: i32) -> (i32, i32, i32, i32) {
    %c0_i32 = arith.constant 0 : i32
    %c0_i32_0 = arith.constant 0 : i32
    %c0_i32_1 = arith.constant 0 : i32
    %c0_i32_2 = arith.constant 0 : i32
    return %arg0, %c0_i32, %c0_i32_0, %c0_i32_1 : i32, i32, i32, i32
  }
}

</mosaic_0001>

<llo_original>
// kernel: tpu_custom_call.1
$region0: #{tpu_custom_call.1}
  #allocation0 [shape = 'u32[]', space=smem, size = 0x4, offset = 0x4, fixed_abs, tag = 'smem constant byte address 0x4 - core index']
  #allocation1 [shape = 'u32[144,128]{1,0:T(1,128)}', space=vmem, size = 0x12000, scoped, tag = 'internal scratch']
  %s0 = inlined_call_operand.hbm [shape: f32[2,8,32], index: 0, kind: input, shape index: {}]
  %s1 = inlined_call_operand.hbm [shape: f32[2,8,32], index: 1, kind: input, shape index: {}]
  %s2 = inlined_call_operand.hbm [shape: f32[2,8,32], index: 2, kind: input, shape index: {}]
  %s3 = inlined_call_operand.hbm [shape: f32[32,32], index: 3, kind: input, shape index: {}]
  %s4 = inlined_call_operand.vmem [shape: f32[1,32], index: 4, kind: input, shape index: {}]
  %s5 = inlined_call_operand.hbm [shape: f32[32,32], index: 5, kind: input, shape index: {}]
  %s6 = inlined_call_operand.vmem [shape: f32[1,32], index: 6, kind: input, shape index: {}]
  %s7 = inlined_call_operand.hbm [shape: f32[32,32], index: 7, kind: input, shape index: {}]
  %s8 = inlined_call_operand.hbm [shape: f32[1,32], index: 8, kind: input, shape index: {}]
  %s9 = inlined_call_operand.vmem [shape: f32[32,32], index: 9, kind: input, shape index: {}]
  %s10 = inlined_call_operand.vmem [shape: f32[1,32], index: 10, kind: input, shape index: {}]
  %s11 = inlined_call_operand.hbm [shape: f32[2,8,32], index: 11, kind: output, shape index: {0}]
  %s12 = inlined_call_operand.hbm [shape: f32[2,4,8,8], index: 12, kind: output, shape index: {1}]
  %13 = xla_tuple %s11, %s12
  %s14 = sld [smem:[#allocation0]]
  $region113: #{tpu_custom_call.1} parent=0
    _
  %s16 = ssub.s32 1, %s14
  %s17 = scalar_select 0, %s16, %s14
  $region1: #{tpu_custom_call.1} parent=0
    #allocation2 [shape = 'u8[8192]{0}', space=vmem, size = 0x2000, scoped, tag = 'input window, operand 0']
    #allocation3 [shape = 's32[2]{0}', space=sflag, size = 0x8, scoped, tag = 'scoped memory for tpu_custom_call.1']
    #allocation4 [shape = 's32[2]{0}', space=sflag, size = 0x8, scoped, tag = 'scoped memory for tpu_custom_call.1']
    #allocation5 [shape = 'u8[8192]{0}', space=vmem, size = 0x2000, scoped, tag = 'input window, operand 1']
    #allocation6 [shape = 's32[2]{0}', space=sflag, size = 0x8, scoped, tag = 'scoped memory for tpu_custom_call.1']
    #allocation7 [shape = 'u8[8192]{0}', space=vmem, size = 0x2000, scoped, tag = 'input window, operand 2']
    #allocation8 [shape = 'u8[16384]{0}', space=vmem, size = 0x4000, scoped, tag = 'input window, operand 3, single buffered']
    #allocation9 [shape = 's32[1]{0}', space=sflag, size = 0x4, scoped, tag = 'scoped memory for tpu_custom_call.1']
    #allocation10 [shape = 'u8[16384]{0}', space=vmem, size = 0x4000, scoped, tag = 'input window, operand 5, single buffered']
    #allocation11 [shape = 'u8[16384]{0}', space=vmem, size = 0x4000, scoped, tag = 'input window, operand 7, single buffered']
    #allocation12 [shape = 's32[1]{0}', space=sflag, size = 0x4, scoped, tag = 'scoped memory for tpu_custom_call.1']
    #allocation13 [shape = 'u8[512]{0}', space=vmem, size = 0x400, scoped, tag = 'input window, operand 8, single buffered']
    #allocation14 [shape = 'u8[8192]{0}', space=vmem, size = 0x2000, scoped, tag = 'output window, operand 0']
    #allocation15 [shape = 'u8[32768]{0}', space=vmem, size = 0x8000, scoped, tag = 'output window, operand 1']
    #allocation16 [shape = 's32[2]{0}', space=sflag, size = 0x8, scoped, tag = 'scoped memory for tpu_custom_call.1']
    %18 = vsyncpa [#allocation3], 0
    %s19 = scalar_lea.sflag [#allocation3], 1
    %20 = vsyncpa %s19, 0
    %21 = vsyncpa [#allocation6], 0
    %s22 = scalar_lea.sflag [#allocation6], 1
    %23 = vsyncpa %s22, 0
    %24 = vsyncpa [#allocation9], 0
    %25 = vsyncpa [#allocation12], 0
    %26 = vsyncpa [#allocation4], 0
    %s27 = scalar_lea.sflag [#allocation4], 1
    %28 = vsyncpa %s27, 0
    %29 = vsyncpa [#allocation16], 0
    %s30 = scalar_lea.sflag [#allocation16], 1
    %31 = vsyncpa %s30, 0
    loop: start=0, step=1, limit=4
    $region2: #{tpu_custom_call.1} parent=1 // loop_pre_header
      _
    $region3: #{tpu_custom_call.1} parent=1 // loop_header
      %s33 = sphi 0, %s37
      %p34 = scmp.ge.s32.totalorder %s33, 4
      %s43 = sphi 0, %s45
      %s46 = sphi 0, %s43
      %s47 = sphi 0, %s46
      %s63 = sphi 0, %s47
      %s69 = sphi 0, %s71
      %s72 = sphi 0, %s69
      %s73 = sphi 0, %s72
      %s89 = sphi 0, %s73
      %s95 = sphi 0, %s97
      %s98 = sphi 0, %s95
      %s99 = sphi 0, %s98
      %s115 = sphi 0, %s99
      %s119 = sphi 0, %s119
      %s121 = sphi 0, %s119
      %s122 = sphi 0, %s121
      %s136 = sphi 0, %s122
      %s140 = sphi 0, %s140
      %s142 = sphi 0, %s140
      %s143 = sphi 0, %s142
      %s157 = sphi 0, %s143
      %s161 = sphi 0, %s161
      %s163 = sphi 0, %s161
      %s164 = sphi 0, %s163
      %s178 = sphi 0, %s164
      %s182 = sphi 0, %s182
      %s184 = sphi 0, %s182
      %s185 = sphi 0, %s184
      %s199 = sphi 0, %s185
      %s203 = sphi 0, %s203
      %s205 = sphi 0, %s203
      %s206 = sphi 0, %s205
      %s220 = sphi 0, %s206
      %s224 = sphi 0, %s224
      %s226 = sphi 0, %s224
      %s227 = sphi 0, %s226
      %s241 = sphi 0, %s227
      %s245 = sphi 0, %s245
      %s247 = sphi 0, %s245
      %s248 = sphi 0, %s247
      %s262 = sphi 0, %s248
      %s266 = sphi 0, %s266
      %s268 = sphi 0, %s266
      %s269 = sphi 0, %s268
      %s283 = sphi 0, %s269
      %s289 = sphi 0, %s291
      %s292 = sphi 0, %s289
      %s293 = sphi 0, %s292
      %s309 = sphi 0, %s293
      %s315 = sphi 0, %s317
      %s318 = sphi 0, %s315
      %s319 = sphi 0, %s318
      %s335 = sphi 0, %s319
    $region4: #{tpu_custom_call.1} parent=1 // loop_header_branch
      %36 = sbr.rel (%p34) target = $region8
    $region5: #{tpu_custom_call.1} parent=1 // loop_body
      %s38 = ssub.s32 %s33, 1
      %s39 = ssub.s32 %s33, 2
      %s40 = sadd.s32 %s33, 1
      %s41 = ssub.s32 %s33, %s40
      %p42 = scmp.eq.s32.totalorder %s41, 0
      %s44 = sadd.s32 %s43, 1
      %s45 = scalar_select %p42, %s43, %s44
      %p48 = pneg %p42
      %p49 = scmp.eq.s32.totalorder %s33, 1
      %p50 = por %p48, %p49
      %p51 = scmp.ne.s32.totalorder %s43, %s46
      %p52 = scmp.eq.s32.totalorder %s33, 0
      %p53 = por %p51, %p52
      %p54 = scmp.ne.s32.totalorder %s43, %s46
      %p55 = scmp.eq.s32.totalorder %s38, 1
      %p56 = por %p54, %p55
      %p57 = scmp.ne.s32.totalorder %s46, %s47
      %p58 = scmp.eq.s32.totalorder %s38, 0
      %p59 = por %p57, %p58
      %p60 = scmp.ne.s32.totalorder %s46, %s47
      %p61 = scmp.eq.s32.totalorder %s39, 1
      %p62 = por %p60, %p61
      %p64 = scmp.ne.s32.totalorder %s47, %s63
      %p65 = scmp.eq.s32.totalorder %s39, 0
      %p66 = por %p64, %p65
      %s67 = ssub.s32 %s33, %s40
      %p68 = scmp.eq.s32.totalorder %s67, 0
      %s70 = sadd.s32 %s69, 1
      %s71 = scalar_select %p68, %s69, %s70
      %p74 = pneg %p68
      %p75 = scmp.eq.s32.totalorder %s33, 1
      %p76 = por %p74, %p75
      %p77 = scmp.ne.s32.totalorder %s69, %s72
      %p78 = scmp.eq.s32.totalorder %s33, 0
      %p79 = por %p77, %p78
      %p80 = scmp.ne.s32.totalorder %s69, %s72
      %p81 = scmp.eq.s32.totalorder %s38, 1
      %p82 = por %p80, %p81
      %p83 = scmp.ne.s32.totalorder %s72, %s73
      %p84 = scmp.eq.s32.totalorder %s38, 0
      %p85 = por %p83, %p84
      %p86 = scmp.ne.s32.totalorder %s72, %s73
      %p87 = scmp.eq.s32.totalorder %s39, 1
      %p88 = por %p86, %p87
      %p90 = scmp.ne.s32.totalorder %s73, %s89
      %p91 = scmp.eq.s32.totalorder %s39, 0
      %p92 = por %p90, %p91
      %s93 = ssub.s32 %s33, %s40
      %p94 = scmp.eq.s32.totalorder %s93, 0
      %s96 = sadd.s32 %s95, 1
      %s97 = scalar_select %p94, %s95, %s96
      %p100 = pneg %p94
      %p101 = scmp.eq.s32.totalorder %s33, 1
      %p102 = por %p100, %p101
      %p103 = scmp.ne.s32.totalorder %s95, %s98
      %p104 = scmp.eq.s32.totalorder %s33, 0
      %p105 = por %p103, %p104
      %p106 = scmp.ne.s32.totalorder %s95, %s98
      %p107 = scmp.eq.s32.totalorder %s38, 1
      %p108 = por %p106, %p107
      %p109 = scmp.ne.s32.totalorder %s98, %s99
      %p110 = scmp.eq.s32.totalorder %s38, 0
      %p111 = por %p109, %p110
      %p112 = scmp.ne.s32.totalorder %s98, %s99
      %p113 = scmp.eq.s32.totalorder %s39, 1
      %p114 = por %p112, %p113
      %p116 = scmp.ne.s32.totalorder %s99, %s115
      %p117 = scmp.eq.s32.totalorder %s39, 0
      %p118 = por %p116, %p117
      %s120 = sadd.s32 %s119, 1
      %p123 = scmp.eq.s32.totalorder %s33, 1
      %p124 = scmp.ne.s32.totalorder %s119, %s121
      %p125 = scmp.eq.s32.totalorder %s33, 0
      %p126 = por %p124, %p125
      %p127 = scmp.ne.s32.totalorder %s119, %s121
      %p128 = scmp.eq.s32.totalorder %s38, 1
      %p129 = por %p127, %p128
      %p130 = scmp.ne.s32.totalorder %s121, %s122
      %p131 = scmp.eq.s32.totalorder %s38, 0
      %p132 = por %p130, %p131
      %p133 = scmp.ne.s32.totalorder %s121, %s122
      %p134 = scmp.eq.s32.totalorder %s39, 1
      %p135 = por %p133, %p134
      %p137 = scmp.ne.s32.totalorder %s122, %s136
      %p138 = scmp.eq.s32.totalorder %s39, 0
      %p139 = por %p137, %p138
      %s141 = sadd.s32 %s140, 1
      %p144 = scmp.eq.s32.totalorder %s33, 1
      %p145 = scmp.ne.s32.totalorder %s140, %s142
      %p146 = scmp.eq.s32.totalorder %s33, 0
      %p147 = por %p145, %p146
      %p148 = scmp.ne.s32.totalorder %s140, %s142
      %p149 = scmp.eq.s32.totalorder %s38, 1
      %p150 = por %p148, %p149
      %p151 = scmp.ne.s32.totalorder %s142, %s143
      %p152 = scmp.eq.s32.totalorder %s38, 0
      %p153 = por %p151, %p152
      %p154 = scmp.ne.s32.totalorder %s142, %s143
      %p155 = scmp.eq.s32.totalorder %s39, 1
      %p156 = por %p154, %p155
      %p158 = scmp.ne.s32.totalorder %s143, %s157
      %p159 = scmp.eq.s32.totalorder %s39, 0
      %p160 = por %p158, %p159
      %s162 = sadd.s32 %s161, 1
      %p165 = scmp.eq.s32.totalorder %s33, 1
      %p166 = scmp.ne.s32.totalorder %s161, %s163
      %p167 = scmp.eq.s32.totalorder %s33, 0
      %p168 = por %p166, %p167
      %p169 = scmp.ne.s32.totalorder %s161, %s163
      %p170 = scmp.eq.s32.totalorder %s38, 1
      %p171 = por %p169, %p170
      %p172 = scmp.ne.s32.totalorder %s163, %s164
      %p173 = scmp.eq.s32.totalorder %s38, 0
      %p174 = por %p172, %p173
      %p175 = scmp.ne.s32.totalorder %s163, %s164
      %p176 = scmp.eq.s32.totalorder %s39, 1
      %p177 = por %p175, %p176
      %p179 = scmp.ne.s32.totalorder %s164, %s178
      %p180 = scmp.eq.s32.totalorder %s39, 0
      %p181 = por %p179, %p180
      %s183 = sadd.s32 %s182, 1
      %p186 = scmp.eq.s32.totalorder %s33, 1
      %p187 = scmp.ne.s32.totalorder %s182, %s184
      %p188 = scmp.eq.s32.totalorder %s33, 0
      %p189 = por %p187, %p188
      %p190 = scmp.ne.s32.totalorder %s182, %s184
      %p191 = scmp.eq.s32.totalorder %s38, 1
      %p192 = por %p190, %p191
      %p193 = scmp.ne.s32.totalorder %s184, %s185
      %p194 = scmp.eq.s32.totalorder %s38, 0
      %p195 = por %p193, %p194
      %p196 = scmp.ne.s32.totalorder %s184, %s185
      %p197 = scmp.eq.s32.totalorder %s39, 1
      %p198 = por %p196, %p197
      %p200 = scmp.ne.s32.totalorder %s185, %s199
      %p201 = scmp.eq.s32.totalorder %s39, 0
      %p202 = por %p200, %p201
      %s204 = sadd.s32 %s203, 1
      %p207 = scmp.eq.s32.totalorder %s33, 1
      %p208 = scmp.ne.s32.totalorder %s203, %s205
      %p209 = scmp.eq.s32.totalorder %s33, 0
      %p210 = por %p208, %p209
      %p211 = scmp.ne.s32.totalorder %s203, %s205
      %p212 = scmp.eq.s32.totalorder %s38, 1
      %p213 = por %p211, %p212
      %p214 = scmp.ne.s32.totalorder %s205, %s206
      %p215 = scmp.eq.s32.totalorder %s38, 0
      %p216 = por %p214, %p215
      %p217 = scmp.ne.s32.totalorder %s205, %s206
      %p218 = scmp.eq.s32.totalorder %s39, 1
      %p219 = por %p217, %p218
      %p221 = scmp.ne.s32.totalorder %s206, %s220
      %p222 = scmp.eq.s32.totalorder %s39, 0
      %p223 = por %p221, %p222
      %s225 = sadd.s32 %s224, 1
      %p228 = scmp.eq.s32.totalorder %s33, 1
      %p229 = scmp.ne.s32.totalorder %s224, %s226
      %p230 = scmp.eq.s32.totalorder %s33, 0
      %p231 = por %p229, %p230
      %p232 = scmp.ne.s32.totalorder %s224, %s226
      %p233 = scmp.eq.s32.totalorder %s38, 1
      %p234 = por %p232, %p233
      %p235 = scmp.ne.s32.totalorder %s226, %s227
      %p236 = scmp.eq.s32.totalorder %s38, 0
      %p237 = por %p235, %p236
      %p238 = scmp.ne.s32.totalorder %s226, %s227
      %p239 = scmp.eq.s32.totalorder %s39, 1
      %p240 = por %p238, %p239
      %p242 = scmp.ne.s32.totalorder %s227, %s241
      %p243 = scmp.eq.s32.totalorder %s39, 0
      %p244 = por %p242, %p243
      %s246 = sadd.s32 %s245, 1
      %p249 = scmp.eq.s32.totalorder %s33, 1
      %p250 = scmp.ne.s32.totalorder %s245, %s247
      %p251 = scmp.eq.s32.totalorder %s33, 0
      %p252 = por %p250, %p251
      %p253 = scmp.ne.s32.totalorder %s245, %s247
      %p254 = scmp.eq.s32.totalorder %s38, 1
      %p255 = por %p253, %p254
      %p256 = scmp.ne.s32.totalorder %s247, %s248
      %p257 = scmp.eq.s32.totalorder %s38, 0
      %p258 = por %p256, %p257
      %p259 = scmp.ne.s32.totalorder %s247, %s248
      %p260 = scmp.eq.s32.totalorder %s39, 1
      %p261 = por %p259, %p260
      %p263 = scmp.ne.s32.totalorder %s248, %s262
      %p264 = scmp.eq.s32.totalorder %s39, 0
      %p265 = por %p263, %p264
      %s267 = sadd.s32 %s266, 1
      %p270 = scmp.eq.s32.totalorder %s33, 1
      %p271 = scmp.ne.s32.totalorder %s266, %s268
      %p272 = scmp.eq.s32.totalorder %s33, 0
      %p273 = por %p271, %p272
      %p274 = scmp.ne.s32.totalorder %s266, %s268
      %p275 = scmp.eq.s32.totalorder %s38, 1
      %p276 = por %p274, %p275
      %p277 = scmp.ne.s32.totalorder %s268, %s269
      %p278 = scmp.eq.s32.totalorder %s38, 0
      %p279 = por %p277, %p278
      %p280 = scmp.ne.s32.totalorder %s268, %s269
      %p281 = scmp.eq.s32.totalorder %s39, 1
      %p282 = por %p280, %p281
      %p284 = scmp.ne.s32.totalorder %s269, %s283
      %p285 = scmp.eq.s32.totalorder %s39, 0
      %p286 = por %p284, %p285
      %s287 = ssub.s32 %s33, %s40
      %p288 = scmp.eq.s32.totalorder %s287, 0
      %s290 = sadd.s32 %s289, 1
      %s291 = scalar_select %p288, %s289, %s290
      %p294 = pneg %p288
      %p295 = scmp.eq.s32.totalorder %s33, 1
      %p296 = por %p294, %p295
      %p297 = scmp.ne.s32.totalorder %s289, %s292
      %p298 = scmp.eq.s32.totalorder %s33, 0
      %p299 = por %p297, %p298
      %p300 = scmp.ne.s32.totalorder %s289, %s292
      %p301 = scmp.eq.s32.totalorder %s38, 1
      %p302 = por %p300, %p301
      %p303 = scmp.ne.s32.totalorder %s292, %s293
      %p304 = scmp.eq.s32.totalorder %s38, 0
      %p305 = por %p303, %p304
      %p306 = scmp.ne.s32.totalorder %s292, %s293
      %p307 = scmp.eq.s32.totalorder %s39, 1
      %p308 = por %p306, %p307
      %p310 = scmp.ne.s32.totalorder %s293, %s309
      %p311 = scmp.eq.s32.totalorder %s39, 0
      %p312 = por %p310, %p311
      %s313 = ssub.s32 %s33, %s40
      %p314 = scmp.eq.s32.totalorder %s313, 0
      %s316 = sadd.s32 %s315, 1
      %s317 = scalar_select %p314, %s315, %s316
      %p320 = pneg %p314
      %p321 = scmp.eq.s32.totalorder %s33, 1
      %p322 = por %p320, %p321
      %p323 = scmp.ne.s32.totalorder %s315, %s318
      %p324 = scmp.eq.s32.totalorder %s33, 0
      %p325 = por %p323, %p324
      %p326 = scmp.ne.s32.totalorder %s315, %s318
      %p327 = scmp.eq.s32.totalorder %s38, 1
      %p328 = por %p326, %p327
      %p329 = scmp.ne.s32.totalorder %s318, %s319
      %p330 = scmp.eq.s32.totalorder %s38, 0
      %p331 = por %p329, %p330
      %p332 = scmp.ne.s32.totalorder %s318, %s319
      %p333 = scmp.eq.s32.totalorder %s39, 1
      %p334 = por %p332, %p333
      %p336 = scmp.ne.s32.totalorder %s319, %s335
      %p337 = scmp.eq.s32.totalorder %s39, 0
      %p338 = por %p336, %p337
      %p339 = scmp.le.s32.totalorder 1, %s33
      %p340 = scmp.lt.s32.totalorder %s33, 3
      %p341 = pnand %p339, %p340
      %p342 = pneg %p341
      // Predicated region
      $region9: #{tpu_custom_call.1} parent=5 // pred_check
        _
      $region10: #{tpu_custom_call.1} parent=5 // pred_check_branch
        %344 = sbr.rel (%p341) target = $region12
      $region11: #{tpu_custom_call.1} parent=5 // pred_region
        %s345 = ssub.s32 %s33, 1
        // Predicated region
        $region13: #{tpu_custom_call.1} parent=11 // pred_check
          %p346 = pneg %p132
        $region14: #{tpu_custom_call.1} parent=11 // pred_check_branch
          %348 = sbr.rel (%p346) target = $region16
        $region15: #{tpu_custom_call.1} parent=11 // pred_region
          %s350 = ssub.s32 512, 512
          %351 = vsyncadd [#allocation9], %s350
          %s352 = sshll.u32 [#allocation8], 4
          %s353 = int_to_ptr.vmem [resolvable:$true] %s352
          %358 = dma.hbm_to_vmem [thread:$0]  %s3, 512, %s353, [#allocation9], 128, 128, 8
        $region16: #{tpu_custom_call.1} parent=11 // pred_fallthru
          _
        // Predicated region
        $region17: #{tpu_custom_call.1} parent=11 // pred_check
          %p359 = pneg %p153
        $region18: #{tpu_custom_call.1} parent=11 // pred_check_branch
          %361 = sbr.rel (%p359) target = $region20
        $region19: #{tpu_custom_call.1} parent=11 // pred_region
          _
        $region20: #{tpu_custom_call.1} parent=11 // pred_fallthru
          _
        // Predicated region
        $region21: #{tpu_custom_call.1} parent=11 // pred_check
          %p362 = pneg %p174
        $region22: #{tpu_custom_call.1} parent=11 // pred_check_branch
          %364 = sbr.rel (%p362) target = $region24
        $region23: #{tpu_custom_call.1} parent=11 // pred_region
          %s366 = ssub.s32 512, 512
          %367 = vsyncadd [#allocation9], %s366
          %s368 = sshll.u32 [#allocation10], 4
          %s369 = int_to_ptr.vmem [resolvable:$true] %s368
          %374 = dma.hbm_to_vmem [thread:$0]  %s5, 512, %s369, [#allocation9], 128, 128, 8
        $region24: #{tpu_custom_call.1} parent=11 // pred_fallthru
          _
        // Predicated region
        $region25: #{tpu_custom_call.1} parent=11 // pred_check
          %p375 = pneg %p195
        $region26: #{tpu_custom_call.1} parent=11 // pred_check_branch
          %377 = sbr.rel (%p375) target = $region28
        $region27: #{tpu_custom_call.1} parent=11 // pred_region
          _
        $region28: #{tpu_custom_call.1} parent=11 // pred_fallthru
          _
        // Predicated region
        $region29: #{tpu_custom_call.1} parent=11 // pred_check
          %p378 = pneg %p216
        $region30: #{tpu_custom_call.1} parent=11 // pred_check_branch
          %380 = sbr.rel (%p378) target = $region32
        $region31: #{tpu_custom_call.1} parent=11 // pred_region
          %s382 = ssub.s32 512, 512
          %383 = vsyncadd [#allocation12], %s382
          %s384 = sshll.u32 [#allocation11], 4
          %s385 = int_to_ptr.vmem [resolvable:$true] %s384
          %390 = dma.hbm_to_vmem [thread:$0]  %s7, 512, %s385, [#allocation12], 128, 128, 8
        $region32: #{tpu_custom_call.1} parent=11 // pred_fallthru
          _
        // Predicated region
        $region33: #{tpu_custom_call.1} parent=11 // pred_check
          %p391 = pneg %p237
        $region34: #{tpu_custom_call.1} parent=11 // pred_check_branch
          %393 = sbr.rel (%p391) target = $region36
        $region35: #{tpu_custom_call.1} parent=11 // pred_region
          %s395 = ssub.s32 16, 16
          %396 = vsyncadd [#allocation12], %s395
          %s398 = sshll.u32 [#allocation13], 4
          %s399 = int_to_ptr.vmem [resolvable:$true] %s398
          %401 = dma.hbm_to_vmem [thread:$0]  %s8, 16, %s399, [#allocation12]
        $region36: #{tpu_custom_call.1} parent=11 // pred_fallthru
          _
        // Predicated region
        $region37: #{tpu_custom_call.1} parent=11 // pred_check
          %p402 = pneg %p258
        $region38: #{tpu_custom_call.1} parent=11 // pred_check_branch
          %404 = sbr.rel (%p402) target = $region40
        $region39: #{tpu_custom_call.1} parent=11 // pred_region
          _
        $region40: #{tpu_custom_call.1} parent=11 // pred_fallthru
          _
        // Predicated region
        $region41: #{tpu_custom_call.1} parent=11 // pred_check
          %p405 = pneg %p279
        $region42: #{tpu_custom_call.1} parent=11 // pred_check_branch
          %407 = sbr.rel (%p405) target = $region44
        $region43: #{tpu_custom_call.1} parent=11 // pred_region
          _
        $region44: #{tpu_custom_call.1} parent=11 // pred_fallthru
          _
      $region12: #{tpu_custom_call.1} parent=5 // pred_fallthru
        _
      %p408 = scmp.lt.s32.totalorder %s33, 2
      // Predicated region
      $region45: #{tpu_custom_call.1} parent=5 // pred_check
        %p409 = pneg %p408
      $region46: #{tpu_custom_call.1} parent=5 // pred_check_branch
        %411 = sbr.rel (%p409) target = $region48
      $region47: #{tpu_custom_call.1} parent=5 // pred_region
        // Predicated region
        $region49: #{tpu_custom_call.1} parent=47 // pred_check
          %p412 = pneg %p53
        $region50: #{tpu_custom_call.1} parent=47 // pred_check_branch
          %414 = sbr.rel (%p412) target = $region52
        $region51: #{tpu_custom_call.1} parent=47 // pred_region
          %s415 = sand.u32 %s43, 1
          %s416 = scalar_lea.sflag [#allocation3], %s415
          %s417 = sand.u32 %s43, 1
          %s418 = smul.addr %s417, 8
          %s419 = scalar_lea.vmem [#allocation2], %s418
          %s421 = ssub.s32 128, 128
          %422 = vsyncadd %s416, %s421
          %s423 = smul.addr %s33, 128
          %s424 = scalar_lea.hbm %s0, %s423
          %s426 = sshll.u32 %s419, 4
          %s427 = int_to_ptr.vmem [resolvable:$true] %s426
          %429 = dma.hbm_to_vmem [thread:$0]  %s424, 128, %s427, %s416
        $region52: #{tpu_custom_call.1} parent=47 // pred_fallthru
          _
        // Predicated region
        $region53: #{tpu_custom_call.1} parent=47 // pred_check
          %p430 = pneg %p79
        $region54: #{tpu_custom_call.1} parent=47 // pred_check_branch
          %432 = sbr.rel (%p430) target = $region56
        $region55: #{tpu_custom_call.1} parent=47 // pred_region
          %s433 = sand.u32 %s33, 1
          %s434 = scalar_lea.sflag [#allocation6], %s433
          %s435 = sand.u32 %s69, 1
          %s436 = smul.addr %s435, 8
          %s437 = scalar_lea.vmem [#allocation5], %s436
          %s439 = ssub.s32 128, 128
          %440 = vsyncadd %s434, %s439
          %s441 = smul.addr %s33, 128
          %s442 = scalar_lea.hbm %s1, %s441
          %s444 = sshll.u32 %s437, 4
          %s445 = int_to_ptr.vmem [resolvable:$true] %s444
          %447 = dma.hbm_to_vmem [thread:$0]  %s442, 128, %s445, %s434
        $region56: #{tpu_custom_call.1} parent=47 // pred_fallthru
          _
        // Predicated region
        $region57: #{tpu_custom_call.1} parent=47 // pred_check
          %p448 = pneg %p105
        $region58: #{tpu_custom_call.1} parent=47 // pred_check_branch
          %450 = sbr.rel (%p448) target = $region60
        $region59: #{tpu_custom_call.1} parent=47 // pred_region
          %s451 = sand.u32 %s33, 1
          %s452 = scalar_lea.sflag [#allocation6], %s451
          %s453 = sand.u32 %s95, 1
          %s454 = smul.addr %s453, 8
          %s455 = scalar_lea.vmem [#allocation7], %s454
          %s457 = ssub.s32 128, 128
          %458 = vsyncadd %s452, %s457
          %s459 = smul.addr %s33, 128
          %s460 = scalar_lea.hbm %s2, %s459
          %s462 = sshll.u32 %s455, 4
          %s463 = int_to_ptr.vmem [resolvable:$true] %s462
          %465 = dma.hbm_to_vmem [thread:$0]  %s460, 128, %s463, %s452
        $region60: #{tpu_custom_call.1} parent=47 // pred_fallthru
          _
      $region48: #{tpu_custom_call.1} parent=5 // pred_fallthru
        _
      %p466 = scmp.le.s32.totalorder 1, %s33
      %p467 = scmp.lt.s32.totalorder %s33, 3
      %p468 = pnand %p466, %p467
      %p469 = pneg %p468
      // Predicated region
      $region61: #{tpu_custom_call.1} parent=5 // pred_check
        _
      $region62: #{tpu_custom_call.1} parent=5 // pred_check_branch
        %471 = sbr.rel (%p468) target = $region64
      $region63: #{tpu_custom_call.1} parent=5 // pred_region
        %s472 = ssub.s32 %s33, 1
        %s473 = sand.u32 %s46, 1
        %s474 = scalar_lea.sflag [#allocation3], %s473
        %s475 = sand.u32 %s46, 1
        %s476 = smul.addr %s475, 8
        %s477 = scalar_lea.vmem [#allocation2], %s476
        // Predicated region
        $region65: #{tpu_custom_call.1} parent=63 // pred_check
          %p478 = pneg %p59
        $region66: #{tpu_custom_call.1} parent=63 // pred_check_branch
          %480 = sbr.rel (%p478) target = $region68
        $region67: #{tpu_custom_call.1} parent=63 // pred_region
          %481 = dma.done %s474, 128
        $region68: #{tpu_custom_call.1} parent=63 // pred_fallthru
          _
        %s482 = sand.u32 %s38, 1
        %s483 = scalar_lea.sflag [#allocation6], %s482
        %s484 = sand.u32 %s72, 1
        %s485 = smul.addr %s484, 8
        %s486 = scalar_lea.vmem [#allocation5], %s485
        // Predicated region
        $region69: #{tpu_custom_call.1} parent=63 // pred_check
          %p487 = pneg %p85
        $region70: #{tpu_custom_call.1} parent=63 // pred_check_branch
          %489 = sbr.rel (%p487) target = $region72
        $region71: #{tpu_custom_call.1} parent=63 // pred_region
          %490 = dma.done %s483, 128
        $region72: #{tpu_custom_call.1} parent=63 // pred_fallthru
          _
        %s491 = sand.u32 %s38, 1
        %s492 = scalar_lea.sflag [#allocation6], %s491
        %s493 = sand.u32 %s98, 1
        %s494 = smul.addr %s493, 8
        %s495 = scalar_lea.vmem [#allocation7], %s494
        // Predicated region
        $region73: #{tpu_custom_call.1} parent=63 // pred_check
          %p496 = pneg %p111
        $region74: #{tpu_custom_call.1} parent=63 // pred_check_branch
          %498 = sbr.rel (%p496) target = $region76
        $region75: #{tpu_custom_call.1} parent=63 // pred_region
          %499 = dma.done %s492, 128
        $region76: #{tpu_custom_call.1} parent=63 // pred_fallthru
          _
        // Predicated region
        $region77: #{tpu_custom_call.1} parent=63 // pred_check
          %p500 = pneg %p132
        $region78: #{tpu_custom_call.1} parent=63 // pred_check_branch
          %502 = sbr.rel (%p500) target = $region80
        $region79: #{tpu_custom_call.1} parent=63 // pred_region
          %503 = dma.done [#allocation9], 512
        $region80: #{tpu_custom_call.1} parent=63 // pred_fallthru
          _
        // Predicated region
        $region81: #{tpu_custom_call.1} parent=63 // pred_check
          %p504 = pneg %p174
        $region82: #{tpu_custom_call.1} parent=63 // pred_check_branch
          %506 = sbr.rel (%p504) target = $region84
        $region83: #{tpu_custom_call.1} parent=63 // pred_region
          %507 = dma.done [#allocation9], 512
        $region84: #{tpu_custom_call.1} parent=63 // pred_fallthru
          _
        // Predicated region
        $region85: #{tpu_custom_call.1} parent=63 // pred_check
          %p508 = pneg %p216
        $region86: #{tpu_custom_call.1} parent=63 // pred_check_branch
          %510 = sbr.rel (%p508) target = $region88
        $region87: #{tpu_custom_call.1} parent=63 // pred_region
          %511 = dma.done [#allocation12], 512
        $region88: #{tpu_custom_call.1} parent=63 // pred_fallthru
          _
        // Predicated region
        $region89: #{tpu_custom_call.1} parent=63 // pred_check
          %p512 = pneg %p237
        $region90: #{tpu_custom_call.1} parent=63 // pred_check_branch
          %514 = sbr.rel (%p512) target = $region92
        $region91: #{tpu_custom_call.1} parent=63 // pred_region
          %515 = dma.done [#allocation12], 16
        $region92: #{tpu_custom_call.1} parent=63 // pred_fallthru
          _
        %s516 = sand.u32 %s46, 1
        %s517 = scalar_lea.sflag [#allocation3], %s516
        %s518 = sand.u32 %s46, 1
        %s519 = smul.addr %s518, 8
        %s520 = scalar_lea.vmem [#allocation2], %s519
        %p521 = pneg %p59
        %p522 = pneg %p56
        %s523 = sand.u32 %s38, 1
        %s524 = scalar_lea.sflag [#allocation6], %s523
        %s525 = sand.u32 %s72, 1
        %s526 = smul.addr %s525, 8
        %s527 = scalar_lea.vmem [#allocation5], %s526
        %p528 = pneg %p85
        %p529 = pneg %p82
        %s530 = sand.u32 %s38, 1
        %s531 = scalar_lea.sflag [#allocation6], %s530
        %s532 = sand.u32 %s98, 1
        %s533 = smul.addr %s532, 8
        %s534 = scalar_lea.vmem [#allocation7], %s533
        %p535 = pneg %p111
        %p536 = pneg %p108
        %p537 = pneg %p132
        %p538 = pneg %p129
        %p539 = pneg %p153
        %p540 = pneg %p150
        %p541 = pneg %p174
        %p542 = pneg %p171
        %p543 = pneg %p195
        %p544 = pneg %p192
        %p545 = pneg %p216
        %p546 = pneg %p213
        %p547 = pneg %p237
        %p548 = pneg %p234
        %p549 = pneg %p258
        %p550 = pneg %p255
        %p551 = pneg %p279
        %p552 = pneg %p276
        %p553 = pneg %p305
        %p554 = pneg %p302
        %s555 = sand.u32 %s292, 1
        %s556 = scalar_lea.sflag [#allocation4], %s555
        %s557 = sand.u32 %s292, 1
        %s558 = smul.addr %s557, 8
        %s559 = scalar_lea.vmem [#allocation14], %s558
        %p560 = pneg %p331
        %p561 = pneg %p328
        %s562 = sand.u32 %s318, 1
        %s563 = scalar_lea.sflag [#allocation16], %s562
        %s564 = sand.u32 %s318, 1
        %s565 = smul.addr %s564, 32
        %s566 = scalar_lea.vmem [#allocation15], %s565
        %v567 = vld [vmem:[%s477] sm:$0xff]
        %v568 = vld [vmem:[%s486] sm:$0xff]
        %v569 = vld [vmem:[%s495] sm:$0xff]
        %v570 = vld [vmem:[#allocation8] sm:$0xff]
        %v571 = vld [vmem:[#allocation8 + $0x8] sm:$0xff]
        %v572 = vld [vmem:[#allocation8 + $0x10] sm:$0xff]
        %v573 = vld [vmem:[#allocation8 + $0x18] sm:$0xff]
        %v574 = vld [vmem:[%s4] sm:$0x1]
        %v576 = vlaneseq
        %v577 = vshrl.u32 %v576, 7
        %v578 = vsub.s32 0, %v577
        %v579 = vrot.slane %v574, %v578
        %vm581 = vcmask 261120
        %v583 = vsel %vm581, %v567, 0
        %v586 = vsel %vm581, %v570, 0
        %v589 = vsel %vm581, %v571, 0
        %v592 = vsel %vm581, %v572, 0
        %v595 = vsel %vm581, %v573, 0
        %597 = vmatprep.subr.mxu0 0.0
        %598 = vmatpush1.xpose.msra.mxu0 %v586
        %599 = vmatprep.subr.mxu0 0.0
        %600 = vmatpush1.xpose.msra.mxu0 %v589
        %601 = vmatprep.subr.mxu0 0.0
        %602 = vmatpush1.xpose.msra.mxu0 %v592
        %603 = vmatprep.subr.mxu0 0.0
        %604 = vmatpush1.xpose.msra.mxu0 %v595
        %605 = vmatprep.subr.mxu0 0.0
        %606 = vmatpush1.xpose.msra.mxu0 0.0
        %607 = vmatprep.subr.mxu0 0.0
        %608 = vmatpush1.xpose.msra.mxu0 0.0
        %609 = vmatprep.subr.mxu0 0.0
        %610 = vmatpush1.xpose.msra.mxu0 0.0
        %611 = vmatprep.subr.mxu0 0.0
        %612 = vmatpush1.xpose.msra.mxu0 0.0
        %613 = vmatprep.subr.mxu0 0.0
        %614 = vmatpush1.xpose.msra.mxu0 0.0
        %615 = vmatprep.subr.mxu0 0.0
        %616 = vmatpush1.xpose.msra.mxu0 0.0
        %617 = vmatprep.subr.mxu0 0.0
        %618 = vmatpush1.xpose.msra.mxu0 0.0
        %619 = vmatprep.subr.mxu0 0.0
        %620 = vmatpush1.xpose.msra.mxu0 0.0
        %621 = vmatprep.subr.mxu0 0.0
        %622 = vmatpush1.xpose.msra.mxu0 0.0
        %623 = vmatprep.subr.mxu0 0.0
        %624 = vmatpush1.xpose.msra.mxu0 0.0
        %625 = vmatprep.subr.mxu0 0.0
        %626 = vmatpush1.xpose.msra.mxu0 0.0
        %627 = vmatprep.subr.mxu0 0.0
        %628 = vmatpush1.xpose.msra.mxu0 0.0
        %629 = vmatprep.subr.mxu0 0.0
        %630 = vmatpush1.xpose.msra.mxu0 0.0
        %631 = vmatprep.subr.mxu0 0.0
        %632 = vmatpush1.xpose.msra.mxu0 0.0
        %633 = vmatprep.subr.mxu0 0.0
        %634 = vmatpush1.xpose.msra.mxu0 0.0
        %635 = vmatprep.subr.mxu0 0.0
        %636 = vmatpush1.xpose.msra.mxu0 0.0
        %637 = vmatprep.subr.mxu0 0.0
        %638 = vmatpush1.xpose.msra.mxu0 0.0
        %639 = vmatprep.subr.mxu0 0.0
        %640 = vmatpush1.xpose.msra.mxu0 0.0
        %641 = vmatprep.subr.mxu0 0.0
        %642 = vmatpush1.xpose.msra.mxu0 0.0
        %643 = vmatprep.subr.mxu0 0.0
        %644 = vmatpush1.xpose.msra.mxu0 0.0
        %645 = vmatprep.subr.mxu0 0.0
        %646 = vmatpush1.xpose.msra.mxu0 0.0
        %647 = vmatprep.subr.mxu0 0.0
        %648 = vmatpush1.xpose.msra.mxu0 0.0
        %649 = vmatprep.subr.mxu0 0.0
        %650 = vmatpush1.xpose.msra.mxu0 0.0
        %651 = vmatprep.subr.mxu0 0.0
        %652 = vmatpush1.xpose.msra.mxu0 0.0
        %653 = vmatprep.subr.mxu0 0.0
        %654 = vmatpush1.xpose.msra.mxu0 0.0
        %655 = vmatprep.subr.mxu0 0.0
        %656 = vmatpush1.xpose.msra.mxu0 0.0
        %657 = vmatprep.subr.mxu0 0.0
        %658 = vmatpush1.xpose.msra.mxu0 0.0
        %659 = vmatprep.subr.mxu0 0.0
        %660 = vmatpush1.xpose.msra.mxu0 0.0
        %661 = vmatprep.mubr.f32.mxu0 0.0
        %662 = vmatmul.mubr.f32.gmra.mrb[0].mxu0 %v583
        %v663 = vpop.f32.mrb[0].mxu0
        %v664 = vadd.f32 %v579, %v663
        %v665 = vpop.f32.mrb[0].mxu0
        %666 = vdwg.mxu0
        %v667 = vld [vmem:[#allocation10] sm:$0xff]
        %v668 = vld [vmem:[#allocation10 + $0x8] sm:$0xff]
        %v669 = vld [vmem:[#allocation10 + $0x10] sm:$0xff]
        %v670 = vld [vmem:[#allocation10 + $0x18] sm:$0xff]
        %v671 = vld [vmem:[%s6] sm:$0x1]
        %v673 = vlaneseq
        %v674 = vshrl.u32 %v673, 7
        %v675 = vsub.s32 0, %v674
        %v676 = vrot.slane %v671, %v675
        %v679 = vsel %vm581, %v568, 0
        %v682 = vsel %vm581, %v667, 0
        %v685 = vsel %vm581, %v668, 0
        %v688 = vsel %vm581, %v669, 0
        %v691 = vsel %vm581, %v670, 0
        %693 = vmatprep.subr.mxu0 0.0
        %694 = vmatpush1.xpose.msra.mxu0 %v682
        %695 = vmatprep.subr.mxu0 0.0
        %696 = vmatpush1.xpose.msra.mxu0 %v685
        %697 = vmatprep.subr.mxu0 0.0
        %698 = vmatpush1.xpose.msra.mxu0 %v688
        %699 = vmatprep.subr.mxu0 0.0
        %700 = vmatpush1.xpose.msra.mxu0 %v691
        %701 = vmatprep.subr.mxu0 0.0
        %702 = vmatpush1.xpose.msra.mxu0 0.0
        %703 = vmatprep.subr.mxu0 0.0
        %704 = vmatpush1.xpose.msra.mxu0 0.0
        %705 = vmatprep.subr.mxu0 0.0
        %706 = vmatpush1.xpose.msra.mxu0 0.0
        %707 = vmatprep.subr.mxu0 0.0
        %708 = vmatpush1.xpose.msra.mxu0 0.0
        %709 = vmatprep.subr.mxu0 0.0
        %710 = vmatpush1.xpose.msra.mxu0 0.0
        %711 = vmatprep.subr.mxu0 0.0
        %712 = vmatpush1.xpose.msra.mxu0 0.0
        %713 = vmatprep.subr.mxu0 0.0
        %714 = vmatpush1.xpose.msra.mxu0 0.0
        %715 = vmatprep.subr.mxu0 0.0
        %716 = vmatpush1.xpose.msra.mxu0 0.0
        %717 = vmatprep.subr.mxu0 0.0
        %718 = vmatpush1.xpose.msra.mxu0 0.0
        %719 = vmatprep.subr.mxu0 0.0
        %720 = vmatpush1.xpose.msra.mxu0 0.0
        %721 = vmatprep.subr.mxu0 0.0
        %722 = vmatpush1.xpose.msra.mxu0 0.0
        %723 = vmatprep.subr.mxu0 0.0
        %724 = vmatpush1.xpose.msra.mxu0 0.0
        %725 = vmatprep.subr.mxu0 0.0
        %726 = vmatpush1.xpose.msra.mxu0 0.0
        %727 = vmatprep.subr.mxu0 0.0
        %728 = vmatpush1.xpose.msra.mxu0 0.0
        %729 = vmatprep.subr.mxu0 0.0
        %730 = vmatpush1.xpose.msra.mxu0 0.0
        %731 = vmatprep.subr.mxu0 0.0
        %732 = vmatpush1.xpose.msra.mxu0 0.0
        %733 = vmatprep.subr.mxu0 0.0
        %734 = vmatpush1.xpose.msra.mxu0 0.0
        %735 = vmatprep.subr.mxu0 0.0
        %736 = vmatpush1.xpose.msra.mxu0 0.0
        %737 = vmatprep.subr.mxu0 0.0
        %738 = vmatpush1.xpose.msra.mxu0 0.0
        %739 = vmatprep.subr.mxu0 0.0
        %740 = vmatpush1.xpose.msra.mxu0 0.0
        %741 = vmatprep.subr.mxu0 0.0
        %742 = vmatpush1.xpose.msra.mxu0 0.0
        %743 = vmatprep.subr.mxu0 0.0
        %744 = vmatpush1.xpose.msra.mxu0 0.0
        %745 = vmatprep.subr.mxu0 0.0
        %746 = vmatpush1.xpose.msra.mxu0 0.0
        %747 = vmatprep.subr.mxu0 0.0
        %748 = vmatpush1.xpose.msra.mxu0 0.0
        %749 = vmatprep.subr.mxu0 0.0
        %750 = vmatpush1.xpose.msra.mxu0 0.0
        %751 = vmatprep.subr.mxu0 0.0
        %752 = vmatpush1.xpose.msra.mxu0 0.0
        %753 = vmatprep.subr.mxu0 0.0
        %754 = vmatpush1.xpose.msra.mxu0 0.0
        %755 = vmatprep.subr.mxu0 0.0
        %756 = vmatpush1.xpose.msra.mxu0 0.0
        %757 = vmatprep.mubr.f32.mxu0 0.0
        %758 = vmatmul.mubr.f32.gmra.mrb[0].mxu0 %v679
        %v759 = vpop.f32.mrb[0].mxu0
        %v760 = vadd.f32 %v676, %v759
        %v761 = vpop.f32.mrb[0].mxu0
        %762 = vdwg.mxu0
        %v763 = vld [vmem:[#allocation11] sm:$0xff]
        %v764 = vld [vmem:[#allocation11 + $0x8] sm:$0xff]
        %v765 = vld [vmem:[#allocation11 + $0x10] sm:$0xff]
        %v766 = vld [vmem:[#allocation11 + $0x18] sm:$0xff]
        %v767 = vld [vmem:[#allocation13] sm:$0x1]
        %v769 = vlaneseq
        %v770 = vshrl.u32 %v769, 7
        %v771 = vsub.s32 0, %v770
        %v772 = vrot.slane %v767, %v771
        %v775 = vsel %vm581, %v569, 0
        %v778 = vsel %vm581, %v763, 0
        %v781 = vsel %vm581, %v764, 0
        %v784 = vsel %vm581, %v765, 0
        %v787 = vsel %vm581, %v766, 0
        %789 = vmatprep.subr.mxu0 0.0
        %790 = vmatpush1.xpose.msra.mxu0 %v778
        %791 = vmatprep.subr.mxu0 0.0
        %792 = vmatpush1.xpose.msra.mxu0 %v781
        %793 = vmatprep.subr.mxu0 0.0
        %794 = vmatpush1.xpose.msra.mxu0 %v784
        %795 = vmatprep.subr.mxu0 0.0
        %796 = vmatpush1.xpose.msra.mxu0 %v787
        %797 = vmatprep.subr.mxu0 0.0
        %798 = vmatpush1.xpose.msra.mxu0 0.0
        %799 = vmatprep.subr.mxu0 0.0
        %800 = vmatpush1.xpose.msra.mxu0 0.0
        %801 = vmatprep.subr.mxu0 0.0
        %802 = vmatpush1.xpose.msra.mxu0 0.0
        %803 = vmatprep.subr.mxu0 0.0
        %804 = vmatpush1.xpose.msra.mxu0 0.0
        %805 = vmatprep.subr.mxu0 0.0
        %806 = vmatpush1.xpose.msra.mxu0 0.0
        %807 = vmatprep.subr.mxu0 0.0
        %808 = vmatpush1.xpose.msra.mxu0 0.0
        %809 = vmatprep.subr.mxu0 0.0
        %810 = vmatpush1.xpose.msra.mxu0 0.0
        %811 = vmatprep.subr.mxu0 0.0
        %812 = vmatpush1.xpose.msra.mxu0 0.0
        %813 = vmatprep.subr.mxu0 0.0
        %814 = vmatpush1.xpose.msra.mxu0 0.0
        %815 = vmatprep.subr.mxu0 0.0
        %816 = vmatpush1.xpose.msra.mxu0 0.0
        %817 = vmatprep.subr.mxu0 0.0
        %818 = vmatpush1.xpose.msra.mxu0 0.0
        %819 = vmatprep.subr.mxu0 0.0
        %820 = vmatpush1.xpose.msra.mxu0 0.0
        %821 = vmatprep.subr.mxu0 0.0
        %822 = vmatpush1.xpose.msra.mxu0 0.0
        %823 = vmatprep.subr.mxu0 0.0
        %824 = vmatpush1.xpose.msra.mxu0 0.0
        %825 = vmatprep.subr.mxu0 0.0
        %826 = vmatpush1.xpose.msra.mxu0 0.0
        %827 = vmatprep.subr.mxu0 0.0
        %828 = vmatpush1.xpose.msra.mxu0 0.0
        %829 = vmatprep.subr.mxu0 0.0
        %830 = vmatpush1.xpose.msra.mxu0 0.0
        %831 = vmatprep.subr.mxu0 0.0
        %832 = vmatpush1.xpose.msra.mxu0 0.0
        %833 = vmatprep.subr.mxu0 0.0
        %834 = vmatpush1.xpose.msra.mxu0 0.0
        %835 = vmatprep.subr.mxu0 0.0
        %836 = vmatpush1.xpose.msra.mxu0 0.0
        %837 = vmatprep.subr.mxu0 0.0
        %838 = vmatpush1.xpose.msra.mxu0 0.0
        %839 = vmatprep.subr.mxu0 0.0
        %840 = vmatpush1.xpose.msra.mxu0 0.0
        %841 = vmatprep.subr.mxu0 0.0
        %842 = vmatpush1.xpose.msra.mxu0 0.0
        %843 = vmatprep.subr.mxu0 0.0
        %844 = vmatpush1.xpose.msra.mxu0 0.0
        %845 = vmatprep.subr.mxu0 0.0
        %846 = vmatpush1.xpose.msra.mxu0 0.0
        %847 = vmatprep.subr.mxu0 0.0
        %848 = vmatpush1.xpose.msra.mxu0 0.0
        %849 = vmatprep.subr.mxu0 0.0
        %850 = vmatpush1.xpose.msra.mxu0 0.0
        %851 = vmatprep.subr.mxu0 0.0
        %852 = vmatpush1.xpose.msra.mxu0 0.0
        %853 = vmatprep.mubr.f32.mxu0 0.0
        %854 = vmatmul.mubr.f32.gmra.mrb[0].mxu0 %v775
        %v855 = vpop.f32.mrb[0].mxu0
        %v856 = vadd.f32 %v772, %v855
        %v857 = vpop.f32.mrb[0].mxu0
        %858 = vdwg.mxu0
        %vm859 = vcmask 64512
        %v861 = vsel %vm859, %v664, 0
        %v864 = vsel %vm859, %v760, 0
        %866 = vmatprep.subr.mxu0 0.0
        %867 = vmatpush1.xpose.msra.mxu0 %v864
        %868 = vmatprep.subr.mxu0 0.0
        %869 = vmatpush1.xpose.msra.mxu0 0.0
        %870 = vmatprep.subr.mxu0 0.0
        %871 = vmatpush1.xpose.msra.mxu0 0.0
        %872 = vmatprep.subr.mxu0 0.0
        %873 = vmatpush1.xpose.msra.mxu0 0.0
        %874 = vmatprep.subr.mxu0 0.0
        %875 = vmatpush1.xpose.msra.mxu0 0.0
        %876 = vmatprep.subr.mxu0 0.0
        %877 = vmatpush1.xpose.msra.mxu0 0.0
        %878 = vmatprep.subr.mxu0 0.0
        %879 = vmatpush1.xpose.msra.mxu0 0.0
        %880 = vmatprep.subr.mxu0 0.0
        %881 = vmatpush1.xpose.msra.mxu0 0.0
        %882 = vmatprep.subr.mxu0 0.0
        %883 = vmatpush1.xpose.msra.mxu0 0.0
        %884 = vmatprep.subr.mxu0 0.0
        %885 = vmatpush1.xpose.msra.mxu0 0.0
        %886 = vmatprep.subr.mxu0 0.0
        %887 = vmatpush1.xpose.msra.mxu0 0.0
        %888 = vmatprep.subr.mxu0 0.0
        %889 = vmatpush1.xpose.msra.mxu0 0.0
        %890 = vmatprep.subr.mxu0 0.0
        %891 = vmatpush1.xpose.msra.mxu0 0.0
        %892 = vmatprep.subr.mxu0 0.0
        %893 = vmatpush1.xpose.msra.mxu0 0.0
        %894 = vmatprep.subr.mxu0 0.0
        %895 = vmatpush1.xpose.msra.mxu0 0.0
        %896 = vmatprep.subr.mxu0 0.0
        %897 = vmatpush1.xpose.msra.mxu0 0.0
        %898 = vmatprep.subr.mxu0 0.0
        %899 = vmatpush1.xpose.msra.mxu0 0.0
        %900 = vmatprep.subr.mxu0 0.0
        %901 = vmatpush1.xpose.msra.mxu0 0.0
        %902 = vmatprep.subr.mxu0 0.0
        %903 = vmatpush1.xpose.msra.mxu0 0.0
        %904 = vmatprep.subr.mxu0 0.0
        %905 = vmatpush1.xpose.msra.mxu0 0.0
        %906 = vmatprep.subr.mxu0 0.0
        %907 = vmatpush1.xpose.msra.mxu0 0.0
        %908 = vmatprep.subr.mxu0 0.0
        %909 = vmatpush1.xpose.msra.mxu0 0.0
        %910 = vmatprep.subr.mxu0 0.0
        %911 = vmatpush1.xpose.msra.mxu0 0.0
        %912 = vmatprep.subr.mxu0 0.0
        %913 = vmatpush1.xpose.msra.mxu0 0.0
        %914 = vmatprep.subr.mxu0 0.0
        %915 = vmatpush1.xpose.msra.mxu0 0.0
        %916 = vmatprep.subr.mxu0 0.0
        %917 = vmatpush1.xpose.msra.mxu0 0.0
        %918 = vmatprep.subr.mxu0 0.0
        %919 = vmatpush1.xpose.msra.mxu0 0.0
        %920 = vmatprep.subr.mxu0 0.0
        %921 = vmatpush1.xpose.msra.mxu0 0.0
        %922 = vmatprep.subr.mxu0 0.0
        %923 = vmatpush1.xpose.msra.mxu0 0.0
        %924 = vmatprep.subr.mxu0 0.0
        %925 = vmatpush1.xpose.msra.mxu0 0.0
        %926 = vmatprep.subr.mxu0 0.0
        %927 = vmatpush1.xpose.msra.mxu0 0.0
        %928 = vmatprep.subr.mxu0 0.0
        %929 = vmatpush1.xpose.msra.mxu0 0.0
        %930 = vmatprep.mubr.f32.mxu0 0.0
        %931 = vmatmul.mubr.f32.gmra.mrb[0].mxu0 %v861
        %v932 = vpop.f32.mrb[0].mxu0
        %v933 = vadd.f32 0.0, %v932
        %v934 = vpop.f32.mrb[0].mxu0
        %935 = vdwg.mxu0
        %v936 = vmul.f32 %v933, 0.35355338
        %v937 = vsel %vm859, %v936, -inf
        %938 = vmax.xlane.f32.xlu0 %v937
        %v939 = vpop.xlane.xlu0 %938
        %v940 = vsub.f32 %v936, %v939
        %v941 = vmul.f32 %v940, 1.442695
        %v942 = vpow.pop %v941
        %v943 = vsel %vm859, %v942, 0.0
        %944 = vadd.xlane.f32.xlu0 %v943
        %v945 = vpop.xlane.xlu0 %944
        %v946 = vrcp.pop %v945
        %v947 = vmul.f32 %v942, %v946
        %948 = vst.msk [vmem:[%s566] sm:$0xff] %vm859, %v947
        %949 = vxpose.xlu0.b32.start [1/16] %v947, 128
        %950 = vxpose.xlu0.b32.cont [2/16] 0.0, 128
        %951 = vxpose.xlu0.b32.cont [3/16] 0.0, 128
        %952 = vxpose.xlu0.b32.cont [4/16] 0.0, 128
        %953 = vxpose.xlu0.b32.cont [5/16] 0.0, 128
        %954 = vxpose.xlu0.b32.cont [6/16] 0.0, 128
        %955 = vxpose.xlu0.b32.cont [7/16] 0.0, 128
        %956 = vxpose.xlu0.b32.cont [8/16] 0.0, 128
        %957 = vxpose.xlu0.b32.cont [9/16] 0.0, 128
        %958 = vxpose.xlu0.b32.cont [10/16] 0.0, 128
        %959 = vxpose.xlu0.b32.cont [11/16] 0.0, 128
        %960 = vxpose.xlu0.b32.cont [12/16] 0.0, 128
        %961 = vxpose.xlu0.b32.cont [13/16] 0.0, 128
        %962 = vxpose.xlu0.b32.cont [14/16] 0.0, 128
        %963 = vxpose.xlu0.b32.cont [15/16] 0.0, 128
        %964 = vxpose.xlu0.b32.end [16/16] 0.0, 128
        %v965 = vpop.trf.xlu0
        %v966 = vpop.trf.xlu0
        %v967 = vpop.trf.xlu0
        %v968 = vpop.trf.xlu0
        %v969 = vpop.trf.xlu0
        %v970 = vpop.trf.xlu0
        %v971 = vpop.trf.xlu0
        %v972 = vpop.trf.xlu0
        %v973 = vpop.trf.xlu0
        %v974 = vpop.trf.xlu0
        %v975 = vpop.trf.xlu0
        %v976 = vpop.trf.xlu0
        %v977 = vpop.trf.xlu0
        %v978 = vpop.trf.xlu0
        %v979 = vpop.trf.xlu0
        %v980 = vpop.trf.xlu0
        %v982 = vsel %vm859, %v965, 0
        %984 = vmatprep.subr.mxu0 0.0
        %985 = vmatpush1.msra.mxu0 %v856
        %986 = vmatprep.subr.mxu0 0.0
        %987 = vmatpush1.msra.mxu0 0.0
        %988 = vmatprep.subr.mxu0 0.0
        %989 = vmatpush1.msra.mxu0 0.0
        %990 = vmatprep.subr.mxu0 0.0
        %991 = vmatpush1.msra.mxu0 0.0
        %992 = vmatprep.subr.mxu0 0.0
        %993 = vmatpush1.msra.mxu0 0.0
        %994 = vmatprep.subr.mxu0 0.0
        %995 = vmatpush1.msra.mxu0 0.0
        %996 = vmatprep.subr.mxu0 0.0
        %997 = vmatpush1.msra.mxu0 0.0
        %998 = vmatprep.subr.mxu0 0.0
        %999 = vmatpush1.msra.mxu0 0.0
        %1000 = vmatprep.subr.mxu0 0.0
        %1001 = vmatpush1.msra.mxu0 0.0
        %1002 = vmatprep.subr.mxu0 0.0
        %1003 = vmatpush1.msra.mxu0 0.0
        %1004 = vmatprep.subr.mxu0 0.0
        %1005 = vmatpush1.msra.mxu0 0.0
        %1006 = vmatprep.subr.mxu0 0.0
        %1007 = vmatpush1.msra.mxu0 0.0
        %1008 = vmatprep.subr.mxu0 0.0
        %1009 = vmatpush1.msra.mxu0 0.0
        %1010 = vmatprep.subr.mxu0 0.0
        %1011 = vmatpush1.msra.mxu0 0.0
        %1012 = vmatprep.subr.mxu0 0.0
        %1013 = vmatpush1.msra.mxu0 0.0
        %1014 = vmatprep.subr.mxu0 0.0
        %1015 = vmatpush1.msra.mxu0 0.0
        %1016 = vmatprep.subr.mxu0 0.0
        %1017 = vmatpush1.msra.mxu0 0.0
        %1018 = vmatprep.subr.mxu0 0.0
        %1019 = vmatpush1.msra.mxu0 0.0
        %1020 = vmatprep.subr.mxu0 0.0
        %1021 = vmatpush1.msra.mxu0 0.0
        %1022 = vmatprep.subr.mxu0 0.0
        %1023 = vmatpush1.msra.mxu0 0.0
        %1024 = vmatprep.subr.mxu0 0.0
        %1025 = vmatpush1.msra.mxu0 0.0
        %1026 = vmatprep.subr.mxu0 0.0
        %1027 = vmatpush1.msra.mxu0 0.0
        %1028 = vmatprep.subr.mxu0 0.0
        %1029 = vmatpush1.msra.mxu0 0.0
        %1030 = vmatprep.subr.mxu0 0.0
        %1031 = vmatpush1.msra.mxu0 0.0
        %1032 = vmatprep.subr.mxu0 0.0
        %1033 = vmatpush1.msra.mxu0 0.0
        %1034 = vmatprep.subr.mxu0 0.0
        %1035 = vmatpush1.msra.mxu0 0.0
        %1036 = vmatprep.subr.mxu0 0.0
        %1037 = vmatpush1.msra.mxu0 0.0
        %1038 = vmatprep.subr.mxu0 0.0
        %1039 = vmatpush1.msra.mxu0 0.0
        %1040 = vmatprep.subr.mxu0 0.0
        %1041 = vmatpush1.msra.mxu0 0.0
        %1042 = vmatprep.subr.mxu0 0.0
        %1043 = vmatpush1.msra.mxu0 0.0
        %1044 = vmatprep.subr.mxu0 0.0
        %1045 = vmatpush1.msra.mxu0 0.0
        %1046 = vmatprep.subr.mxu0 0.0
        %1047 = vmatpush1.msra.mxu0 0.0
        %1048 = vmatprep.mubr.f32.mxu0 0.0
        %1049 = vmatmul.mubr.f32.gmra.mrb[0].mxu0 %v982
        %v1050 = vpop.f32.mrb[0].mxu0
        %v1051 = vadd.f32 0.0, %v1050
        %v1052 = vpop.f32.mrb[0].mxu0
        %1053 = vdwg.mxu0
        %1054 = vrot.lane.b32.xlu0 %v664, 120
        %v1055 = vpop.permute.xlu0 %1054
        %1056 = vrot.lane.b32.xlu0 %v760, 120
        %v1057 = vpop.permute.xlu0 %1056
        %v1058 = vsel %vm859, %v1055, 0
        %v1060 = vsel %vm859, %v1057, 0
        %1062 = vmatprep.subr.mxu0 0.0
        %1063 = vmatpush1.xpose.msra.mxu0 %v1060
        %1064 = vmatprep.subr.mxu0 0.0
        %1065 = vmatpush1.xpose.msra.mxu0 0.0
        %1066 = vmatprep.subr.mxu0 0.0
        %1067 = vmatpush1.xpose.msra.mxu0 0.0
        %1068 = vmatprep.subr.mxu0 0.0
        %1069 = vmatpush1.xpose.msra.mxu0 0.0
        %1070 = vmatprep.subr.mxu0 0.0
        %1071 = vmatpush1.xpose.msra.mxu0 0.0
        %1072 = vmatprep.subr.mxu0 0.0
        %1073 = vmatpush1.xpose.msra.mxu0 0.0
        %1074 = vmatprep.subr.mxu0 0.0
        %1075 = vmatpush1.xpose.msra.mxu0 0.0
        %1076 = vmatprep.subr.mxu0 0.0
        %1077 = vmatpush1.xpose.msra.mxu0 0.0
        %1078 = vmatprep.subr.mxu0 0.0
        %1079 = vmatpush1.xpose.msra.mxu0 0.0
        %1080 = vmatprep.subr.mxu0 0.0
        %1081 = vmatpush1.xpose.msra.mxu0 0.0
        %1082 = vmatprep.subr.mxu0 0.0
        %1083 = vmatpush1.xpose.msra.mxu0 0.0
        %1084 = vmatprep.subr.mxu0 0.0
        %1085 = vmatpush1.xpose.msra.mxu0 0.0
        %1086 = vmatprep.subr.mxu0 0.0
        %1087 = vmatpush1.xpose.msra.mxu0 0.0
        %1088 = vmatprep.subr.mxu0 0.0
        %1089 = vmatpush1.xpose.msra.mxu0 0.0
        %1090 = vmatprep.subr.mxu0 0.0
        %1091 = vmatpush1.xpose.msra.mxu0 0.0
        %1092 = vmatprep.subr.mxu0 0.0
        %1093 = vmatpush1.xpose.msra.mxu0 0.0
        %1094 = vmatprep.subr.mxu0 0.0
        %1095 = vmatpush1.xpose.msra.mxu0 0.0
        %1096 = vmatprep.subr.mxu0 0.0
        %1097 = vmatpush1.xpose.msra.mxu0 0.0
        %1098 = vmatprep.subr.mxu0 0.0
        %1099 = vmatpush1.xpose.msra.mxu0 0.0
        %1100 = vmatprep.subr.mxu0 0.0
        %1101 = vmatpush1.xpose.msra.mxu0 0.0
        %1102 = vmatprep.subr.mxu0 0.0
        %1103 = vmatpush1.xpose.msra.mxu0 0.0
        %1104 = vmatprep.subr.mxu0 0.0
        %1105 = vmatpush1.xpose.msra.mxu0 0.0
        %1106 = vmatprep.subr.mxu0 0.0
        %1107 = vmatpush1.xpose.msra.mxu0 0.0
        %1108 = vmatprep.subr.mxu0 0.0
        %1109 = vmatpush1.xpose.msra.mxu0 0.0
        %1110 = vmatprep.subr.mxu0 0.0
        %1111 = vmatpush1.xpose.msra.mxu0 0.0
        %1112 = vmatprep.subr.mxu0 0.0
        %1113 = vmatpush1.xpose.msra.mxu0 0.0
        %1114 = vmatprep.subr.mxu0 0.0
        %1115 = vmatpush1.xpose.msra.mxu0 0.0
        %1116 = vmatprep.subr.mxu0 0.0
        %1117 = vmatpush1.xpose.msra.mxu0 0.0
        %1118 = vmatprep.subr.mxu0 0.0
        %1119 = vmatpush1.xpose.msra.mxu0 0.0
        %1120 = vmatprep.subr.mxu0 0.0
        %1121 = vmatpush1.xpose.msra.mxu0 0.0
        %1122 = vmatprep.subr.mxu0 0.0
        %1123 = vmatpush1.xpose.msra.mxu0 0.0
        %1124 = vmatprep.subr.mxu0 0.0
        %1125 = vmatpush1.xpose.msra.mxu0 0.0
        %1126 = vmatprep.mubr.f32.mxu0 0.0
        %1127 = vmatmul.mubr.f32.gmra.mrb[0].mxu0 %v1058
        %v1128 = vpop.f32.mrb[0].mxu0
        %v1129 = vadd.f32 0.0, %v1128
        %v1130 = vpop.f32.mrb[0].mxu0
        %1131 = vdwg.mxu0
        %v1132 = vmul.f32 %v1129, 0.35355338
        %v1133 = vsel %vm859, %v1132, -inf
        %1134 = vmax.xlane.f32.xlu0 %v1133
        %v1135 = vpop.xlane.xlu0 %1134
        %v1136 = vsub.f32 %v1132, %v1135
        %v1137 = vmul.f32 %v1136, 1.442695
        %v1138 = vpow.pop %v1137
        %v1139 = vsel %vm859, %v1138, 0.0
        %1140 = vadd.xlane.f32.xlu0 %v1139
        %v1141 = vpop.xlane.xlu0 %1140
        %v1142 = vrcp.pop %v1141
        %v1143 = vmul.f32 %v1138, %v1142
        %s1144 = scalar_lea.vmem %s566, 8 [#allocation15]
        %1145 = vst.msk [vmem:[%s1144] sm:$0xff] %vm859, %v1143
        %1146 = vxpose.xlu0.b32.start [1/16] %v1143, 128
        %1147 = vxpose.xlu0.b32.cont [2/16] 0.0, 128
        %1148 = vxpose.xlu0.b32.cont [3/16] 0.0, 128
        %1149 = vxpose.xlu0.b32.cont [4/16] 0.0, 128
        %1150 = vxpose.xlu0.b32.cont [5/16] 0.0, 128
        %1151 = vxpose.xlu0.b32.cont [6/16] 0.0, 128
        %1152 = vxpose.xlu0.b32.cont [7/16] 0.0, 128
        %1153 = vxpose.xlu0.b32.cont [8/16] 0.0, 128
        %1154 = vxpose.xlu0.b32.cont [9/16] 0.0, 128
        %1155 = vxpose.xlu0.b32.cont [10/16] 0.0, 128
        %1156 = vxpose.xlu0.b32.cont [11/16] 0.0, 128
        %1157 = vxpose.xlu0.b32.cont [12/16] 0.0, 128
        %1158 = vxpose.xlu0.b32.cont [13/16] 0.0, 128
        %1159 = vxpose.xlu0.b32.cont [14/16] 0.0, 128
        %1160 = vxpose.xlu0.b32.cont [15/16] 0.0, 128
        %1161 = vxpose.xlu0.b32.end [16/16] 0.0, 128
        %v1162 = vpop.trf.xlu0
        %v1163 = vpop.trf.xlu0
        %v1164 = vpop.trf.xlu0
        %v1165 = vpop.trf.xlu0
        %v1166 = vpop.trf.xlu0
        %v1167 = vpop.trf.xlu0
        %v1168 = vpop.trf.xlu0
        %v1169 = vpop.trf.xlu0
        %v1170 = vpop.trf.xlu0
        %v1171 = vpop.trf.xlu0
        %v1172 = vpop.trf.xlu0
        %v1173 = vpop.trf.xlu0
        %v1174 = vpop.trf.xlu0
        %v1175 = vpop.trf.xlu0
        %v1176 = vpop.trf.xlu0
        %v1177 = vpop.trf.xlu0
        %1179 = vrot.lane.b32.xlu0 %v856, 120
        %v1180 = vpop.permute.xlu0 %1179
        %v1183 = vsel %vm859, %v1162, 0
        %1185 = vmatprep.subr.mxu0 0.0
        %1186 = vmatpush1.msra.mxu0 %v1180
        %1187 = vmatprep.subr.mxu0 0.0
        %1188 = vmatpush1.msra.mxu0 0.0
        %1189 = vmatprep.subr.mxu0 0.0
        %1190 = vmatpush1.msra.mxu0 0.0
        %1191 = vmatprep.subr.mxu0 0.0
        %1192 = vmatpush1.msra.mxu0 0.0
        %1193 = vmatprep.subr.mxu0 0.0
        %1194 = vmatpush1.msra.mxu0 0.0
        %1195 = vmatprep.subr.mxu0 0.0
        %1196 = vmatpush1.msra.mxu0 0.0
        %1197 = vmatprep.subr.mxu0 0.0
        %1198 = vmatpush1.msra.mxu0 0.0
        %1199 = vmatprep.subr.mxu0 0.0
        %1200 = vmatpush1.msra.mxu0 0.0
        %1201 = vmatprep.subr.mxu0 0.0
        %1202 = vmatpush1.msra.mxu0 0.0
        %1203 = vmatprep.subr.mxu0 0.0
        %1204 = vmatpush1.msra.mxu0 0.0
        %1205 = vmatprep.subr.mxu0 0.0
        %1206 = vmatpush1.msra.mxu0 0.0
        %1207 = vmatprep.subr.mxu0 0.0
        %1208 = vmatpush1.msra.mxu0 0.0
        %1209 = vmatprep.subr.mxu0 0.0
        %1210 = vmatpush1.msra.mxu0 0.0
        %1211 = vmatprep.subr.mxu0 0.0
        %1212 = vmatpush1.msra.mxu0 0.0
        %1213 = vmatprep.subr.mxu0 0.0
        %1214 = vmatpush1.msra.mxu0 0.0
        %1215 = vmatprep.subr.mxu0 0.0
        %1216 = vmatpush1.msra.mxu0 0.0
        %1217 = vmatprep.subr.mxu0 0.0
        %1218 = vmatpush1.msra.mxu0 0.0
        %1219 = vmatprep.subr.mxu0 0.0
        %1220 = vmatpush1.msra.mxu0 0.0
        %1221 = vmatprep.subr.mxu0 0.0
        %1222 = vmatpush1.msra.mxu0 0.0
        %1223 = vmatprep.subr.mxu0 0.0
        %1224 = vmatpush1.msra.mxu0 0.0
        %1225 = vmatprep.subr.mxu0 0.0
        %1226 = vmatpush1.msra.mxu0 0.0
        %1227 = vmatprep.subr.mxu0 0.0
        %1228 = vmatpush1.msra.mxu0 0.0
        %1229 = vmatprep.subr.mxu0 0.0
        %1230 = vmatpush1.msra.mxu0 0.0
        %1231 = vmatprep.subr.mxu0 0.0
        %1232 = vmatpush1.msra.mxu0 0.0
        %1233 = vmatprep.subr.mxu0 0.0
        %1234 = vmatpush1.msra.mxu0 0.0
        %1235 = vmatprep.subr.mxu0 0.0
        %1236 = vmatpush1.msra.mxu0 0.0
        %1237 = vmatprep.subr.mxu0 0.0
        %1238 = vmatpush1.msra.mxu0 0.0
        %1239 = vmatprep.subr.mxu0 0.0
        %1240 = vmatpush1.msra.mxu0 0.0
        %1241 = vmatprep.subr.mxu0 0.0
        %1242 = vmatpush1.msra.mxu0 0.0
        %1243 = vmatprep.subr.mxu0 0.0
        %1244 = vmatpush1.msra.mxu0 0.0
        %1245 = vmatprep.subr.mxu0 0.0
        %1246 = vmatpush1.msra.mxu0 0.0
        %1247 = vmatprep.subr.mxu0 0.0
        %1248 = vmatpush1.msra.mxu0 0.0
        %1249 = vmatprep.mubr.f32.mxu0 0.0
        %1250 = vmatmul.mubr.f32.gmra.mrb[0].mxu0 %v1183
        %v1251 = vpop.f32.mrb[0].mxu0
        %v1252 = vadd.f32 0.0, %v1251
        %v1253 = vpop.f32.mrb[0].mxu0
        %1254 = vdwg.mxu0
        %1255 = vrot.lane.b32.xlu0 %v664, 112
        %v1256 = vpop.permute.xlu0 %1255
        %1257 = vrot.lane.b32.xlu0 %v760, 112
        %v1258 = vpop.permute.xlu0 %1257
        %v1259 = vsel %vm859, %v1256, 0
        %v1261 = vsel %vm859, %v1258, 0
        %1263 = vmatprep.subr.mxu0 0.0
        %1264 = vmatpush1.xpose.msra.mxu0 %v1261
        %1265 = vmatprep.subr.mxu0 0.0
        %1266 = vmatpush1.xpose.msra.mxu0 0.0
        %1267 = vmatprep.subr.mxu0 0.0
        %1268 = vmatpush1.xpose.msra.mxu0 0.0
        %1269 = vmatprep.subr.mxu0 0.0
        %1270 = vmatpush1.xpose.msra.mxu0 0.0
        %1271 = vmatprep.subr.mxu0 0.0
        %1272 = vmatpush1.xpose.msra.mxu0 0.0
        %1273 = vmatprep.subr.mxu0 0.0
        %1274 = vmatpush1.xpose.msra.mxu0 0.0
        %1275 = vmatprep.subr.mxu0 0.0
        %1276 = vmatpush1.xpose.msra.mxu0 0.0
        %1277 = vmatprep.subr.mxu0 0.0
        %1278 = vmatpush1.xpose.msra.mxu0 0.0
        %1279 = vmatprep.subr.mxu0 0.0
        %1280 = vmatpush1.xpose.msra.mxu0 0.0
        %1281 = vmatprep.subr.mxu0 0.0
        %1282 = vmatpush1.xpose.msra.mxu0 0.0
        %1283 = vmatprep.subr.mxu0 0.0
        %1284 = vmatpush1.xpose.msra.mxu0 0.0
        %1285 = vmatprep.subr.mxu0 0.0
        %1286 = vmatpush1.xpose.msra.mxu0 0.0
        %1287 = vmatprep.subr.mxu0 0.0
        %1288 = vmatpush1.xpose.msra.mxu0 0.0
        %1289 = vmatprep.subr.mxu0 0.0
        %1290 = vmatpush1.xpose.msra.mxu0 0.0
        %1291 = vmatprep.subr.mxu0 0.0
        %1292 = vmatpush1.xpose.msra.mxu0 0.0
        %1293 = vmatprep.subr.mxu0 0.0
        %1294 = vmatpush1.xpose.msra.mxu0 0.0
        %1295 = vmatprep.subr.mxu0 0.0
        %1296 = vmatpush1.xpose.msra.mxu0 0.0
        %1297 = vmatprep.subr.mxu0 0.0
        %1298 = vmatpush1.xpose.msra.mxu0 0.0
        %1299 = vmatprep.subr.mxu0 0.0
        %1300 = vmatpush1.xpose.msra.mxu0 0.0
        %1301 = vmatprep.subr.mxu0 0.0
        %1302 = vmatpush1.xpose.msra.mxu0 0.0
        %1303 = vmatprep.subr.mxu0 0.0
        %1304 = vmatpush1.xpose.msra.mxu0 0.0
        %1305 = vmatprep.subr.mxu0 0.0
        %1306 = vmatpush1.xpose.msra.mxu0 0.0
        %1307 = vmatprep.subr.mxu0 0.0
        %1308 = vmatpush1.xpose.msra.mxu0 0.0
        %1309 = vmatprep.subr.mxu0 0.0
        %1310 = vmatpush1.xpose.msra.mxu0 0.0
        %1311 = vmatprep.subr.mxu0 0.0
        %1312 = vmatpush1.xpose.msra.mxu0 0.0
        %1313 = vmatprep.subr.mxu0 0.0
        %1314 = vmatpush1.xpose.msra.mxu0 0.0
        %1315 = vmatprep.subr.mxu0 0.0
        %1316 = vmatpush1.xpose.msra.mxu0 0.0
        %1317 = vmatprep.subr.mxu0 0.0
        %1318 = vmatpush1.xpose.msra.mxu0 0.0
        %1319 = vmatprep.subr.mxu0 0.0
        %1320 = vmatpush1.xpose.msra.mxu0 0.0
        %1321 = vmatprep.subr.mxu0 0.0
        %1322 = vmatpush1.xpose.msra.mxu0 0.0
        %1323 = vmatprep.subr.mxu0 0.0
        %1324 = vmatpush1.xpose.msra.mxu0 0.0
        %1325 = vmatprep.subr.mxu0 0.0
        %1326 = vmatpush1.xpose.msra.mxu0 0.0
        %1327 = vmatprep.mubr.f32.mxu0 0.0
        %1328 = vmatmul.mubr.f32.gmra.mrb[0].mxu0 %v1259
        %v1329 = vpop.f32.mrb[0].mxu0
        %v1330 = vadd.f32 0.0, %v1329
        %v1331 = vpop.f32.mrb[0].mxu0
        %1332 = vdwg.mxu0
        %v1333 = vmul.f32 %v1330, 0.35355338
        %v1334 = vsel %vm859, %v1333, -inf
        %1335 = vmax.xlane.f32.xlu0 %v1334
        %v1336 = vpop.xlane.xlu0 %1335
        %v1337 = vsub.f32 %v1333, %v1336
        %v1338 = vmul.f32 %v1337, 1.442695
        %v1339 = vpow.pop %v1338
        %v1340 = vsel %vm859, %v1339, 0.0
        %1341 = vadd.xlane.f32.xlu0 %v1340
        %v1342 = vpop.xlane.xlu0 %1341
        %v1343 = vrcp.pop %v1342
        %v1344 = vmul.f32 %v1339, %v1343
        %s1345 = scalar_lea.vmem %s566, 16 [#allocation15]
        %1346 = vst.msk [vmem:[%s1345] sm:$0xff] %vm859, %v1344
        %1347 = vxpose.xlu0.b32.start [1/16] %v1344, 128
        %1348 = vxpose.xlu0.b32.cont [2/16] 0.0, 128
        %1349 = vxpose.xlu0.b32.cont [3/16] 0.0, 128
        %1350 = vxpose.xlu0.b32.cont [4/16] 0.0, 128
        %1351 = vxpose.xlu0.b32.cont [5/16] 0.0, 128
        %1352 = vxpose.xlu0.b32.cont [6/16] 0.0, 128
        %1353 = vxpose.xlu0.b32.cont [7/16] 0.0, 128
        %1354 = vxpose.xlu0.b32.cont [8/16] 0.0, 128
        %1355 = vxpose.xlu0.b32.cont [9/16] 0.0, 128
        %1356 = vxpose.xlu0.b32.cont [10/16] 0.0, 128
        %1357 = vxpose.xlu0.b32.cont [11/16] 0.0, 128
        %1358 = vxpose.xlu0.b32.cont [12/16] 0.0, 128
        %1359 = vxpose.xlu0.b32.cont [13/16] 0.0, 128
        %1360 = vxpose.xlu0.b32.cont [14/16] 0.0, 128
        %1361 = vxpose.xlu0.b32.cont [15/16] 0.0, 128
        %1362 = vxpose.xlu0.b32.end [16/16] 0.0, 128
        %v1363 = vpop.trf.xlu0
        %v1364 = vpop.trf.xlu0
        %v1365 = vpop.trf.xlu0
        %v1366 = vpop.trf.xlu0
        %v1367 = vpop.trf.xlu0
        %v1368 = vpop.trf.xlu0
        %v1369 = vpop.trf.xlu0
        %v1370 = vpop.trf.xlu0
        %v1371 = vpop.trf.xlu0
        %v1372 = vpop.trf.xlu0
        %v1373 = vpop.trf.xlu0
        %v1374 = vpop.trf.xlu0
        %v1375 = vpop.trf.xlu0
        %v1376 = vpop.trf.xlu0
        %v1377 = vpop.trf.xlu0
        %v1378 = vpop.trf.xlu0
        %1379 = vrot.lane.b32.xlu0 %v856, 112
        %v1380 = vpop.permute.xlu0 %1379
        %v1383 = vsel %vm859, %v1363, 0
        %1385 = vmatprep.subr.mxu0 0.0
        %1386 = vmatpush1.msra.mxu0 %v1380
        %1387 = vmatprep.subr.mxu0 0.0
        %1388 = vmatpush1.msra.mxu0 0.0
        %1389 = vmatprep.subr.mxu0 0.0
        %1390 = vmatpush1.msra.mxu0 0.0
        %1391 = vmatprep.subr.mxu0 0.0
        %1392 = vmatpush1.msra.mxu0 0.0
        %1393 = vmatprep.subr.mxu0 0.0
        %1394 = vmatpush1.msra.mxu0 0.0
        %1395 = vmatprep.subr.mxu0 0.0
        %1396 = vmatpush1.msra.mxu0 0.0
        %1397 = vmatprep.subr.mxu0 0.0
        %1398 = vmatpush1.msra.mxu0 0.0
        %1399 = vmatprep.subr.mxu0 0.0
        %1400 = vmatpush1.msra.mxu0 0.0
        %1401 = vmatprep.subr.mxu0 0.0
        %1402 = vmatpush1.msra.mxu0 0.0
        %1403 = vmatprep.subr.mxu0 0.0
        %1404 = vmatpush1.msra.mxu0 0.0
        %1405 = vmatprep.subr.mxu0 0.0
        %1406 = vmatpush1.msra.mxu0 0.0
        %1407 = vmatprep.subr.mxu0 0.0
        %1408 = vmatpush1.msra.mxu0 0.0
        %1409 = vmatprep.subr.mxu0 0.0
        %1410 = vmatpush1.msra.mxu0 0.0
        %1411 = vmatprep.subr.mxu0 0.0
        %1412 = vmatpush1.msra.mxu0 0.0
        %1413 = vmatprep.subr.mxu0 0.0
        %1414 = vmatpush1.msra.mxu0 0.0
        %1415 = vmatprep.subr.mxu0 0.0
        %1416 = vmatpush1.msra.mxu0 0.0
        %1417 = vmatprep.subr.mxu0 0.0
        %1418 = vmatpush1.msra.mxu0 0.0
        %1419 = vmatprep.subr.mxu0 0.0
        %1420 = vmatpush1.msra.mxu0 0.0
        %1421 = vmatprep.subr.mxu0 0.0
        %1422 = vmatpush1.msra.mxu0 0.0
        %1423 = vmatprep.subr.mxu0 0.0
        %1424 = vmatpush1.msra.mxu0 0.0
        %1425 = vmatprep.subr.mxu0 0.0
        %1426 = vmatpush1.msra.mxu0 0.0
        %1427 = vmatprep.subr.mxu0 0.0
        %1428 = vmatpush1.msra.mxu0 0.0
        %1429 = vmatprep.subr.mxu0 0.0
        %1430 = vmatpush1.msra.mxu0 0.0
        %1431 = vmatprep.subr.mxu0 0.0
        %1432 = vmatpush1.msra.mxu0 0.0
        %1433 = vmatprep.subr.mxu0 0.0
        %1434 = vmatpush1.msra.mxu0 0.0
        %1435 = vmatprep.subr.mxu0 0.0
        %1436 = vmatpush1.msra.mxu0 0.0
        %1437 = vmatprep.subr.mxu0 0.0
        %1438 = vmatpush1.msra.mxu0 0.0
        %1439 = vmatprep.subr.mxu0 0.0
        %1440 = vmatpush1.msra.mxu0 0.0
        %1441 = vmatprep.subr.mxu0 0.0
        %1442 = vmatpush1.msra.mxu0 0.0
        %1443 = vmatprep.subr.mxu0 0.0
        %1444 = vmatpush1.msra.mxu0 0.0
        %1445 = vmatprep.subr.mxu0 0.0
        %1446 = vmatpush1.msra.mxu0 0.0
        %1447 = vmatprep.subr.mxu0 0.0
        %1448 = vmatpush1.msra.mxu0 0.0
        %1449 = vmatprep.mubr.f32.mxu0 0.0
        %1450 = vmatmul.mubr.f32.gmra.mrb[0].mxu0 %v1383
        %v1451 = vpop.f32.mrb[0].mxu0
        %v1452 = vadd.f32 0.0, %v1451
        %v1453 = vpop.f32.mrb[0].mxu0
        %1454 = vdwg.mxu0
        %1455 = vrot.lane.b32.xlu0 %v664, 104
        %v1456 = vpop.permute.xlu0 %1455
        %1457 = vrot.lane.b32.xlu0 %v760, 104
        %v1458 = vpop.permute.xlu0 %1457
        %v1459 = vsel %vm859, %v1456, 0
        %v1461 = vsel %vm859, %v1458, 0
        %1463 = vmatprep.subr.mxu0 0.0
        %1464 = vmatpush1.xpose.msra.mxu0 %v1461
        %1465 = vmatprep.subr.mxu0 0.0
        %1466 = vmatpush1.xpose.msra.mxu0 0.0
        %1467 = vmatprep.subr.mxu0 0.0
        %1468 = vmatpush1.xpose.msra.mxu0 0.0
        %1469 = vmatprep.subr.mxu0 0.0
        %1470 = vmatpush1.xpose.msra.mxu0 0.0
        %1471 = vmatprep.subr.mxu0 0.0
        %1472 = vmatpush1.xpose.msra.mxu0 0.0
        %1473 = vmatprep.subr.mxu0 0.0
        %1474 = vmatpush1.xpose.msra.mxu0 0.0
        %1475 = vmatprep.subr.mxu0 0.0
        %1476 = vmatpush1.xpose.msra.mxu0 0.0
        %1477 = vmatprep.subr.mxu0 0.0
        %1478 = vmatpush1.xpose.msra.mxu0 0.0
        %1479 = vmatprep.subr.mxu0 0.0
        %1480 = vmatpush1.xpose.msra.mxu0 0.0
        %1481 = vmatprep.subr.mxu0 0.0
        %1482 = vmatpush1.xpose.msra.mxu0 0.0
        %1483 = vmatprep.subr.mxu0 0.0
        %1484 = vmatpush1.xpose.msra.mxu0 0.0
        %1485 = vmatprep.subr.mxu0 0.0
        %1486 = vmatpush1.xpose.msra.mxu0 0.0
        %1487 = vmatprep.subr.mxu0 0.0
        %1488 = vmatpush1.xpose.msra.mxu0 0.0
        %1489 = vmatprep.subr.mxu0 0.0
        %1490 = vmatpush1.xpose.msra.mxu0 0.0
        %1491 = vmatprep.subr.mxu0 0.0
        %1492 = vmatpush1.xpose.msra.mxu0 0.0
        %1493 = vmatprep.subr.mxu0 0.0
        %1494 = vmatpush1.xpose.msra.mxu0 0.0
        %1495 = vmatprep.subr.mxu0 0.0
        %1496 = vmatpush1.xpose.msra.mxu0 0.0
        %1497 = vmatprep.subr.mxu0 0.0
        %1498 = vmatpush1.xpose.msra.mxu0 0.0
        %1499 = vmatprep.subr.mxu0 0.0
        %1500 = vmatpush1.xpose.msra.mxu0 0.0
        %1501 = vmatprep.subr.mxu0 0.0
        %1502 = vmatpush1.xpose.msra.mxu0 0.0
        %1503 = vmatprep.subr.mxu0 0.0
        %1504 = vmatpush1.xpose.msra.mxu0 0.0
        %1505 = vmatprep.subr.mxu0 0.0
        %1506 = vmatpush1.xpose.msra.mxu0 0.0
        %1507 = vmatprep.subr.mxu0 0.0
        %1508 = vmatpush1.xpose.msra.mxu0 0.0
        %1509 = vmatprep.subr.mxu0 0.0
        %1510 = vmatpush1.xpose.msra.mxu0 0.0
        %1511 = vmatprep.subr.mxu0 0.0
        %1512 = vmatpush1.xpose.msra.mxu0 0.0
        %1513 = vmatprep.subr.mxu0 0.0
        %1514 = vmatpush1.xpose.msra.mxu0 0.0
        %1515 = vmatprep.subr.mxu0 0.0
        %1516 = vmatpush1.xpose.msra.mxu0 0.0
        %1517 = vmatprep.subr.mxu0 0.0
        %1518 = vmatpush1.xpose.msra.mxu0 0.0
        %1519 = vmatprep.subr.mxu0 0.0
        %1520 = vmatpush1.xpose.msra.mxu0 0.0
        %1521 = vmatprep.subr.mxu0 0.0
        %1522 = vmatpush1.xpose.msra.mxu0 0.0
        %1523 = vmatprep.subr.mxu0 0.0
        %1524 = vmatpush1.xpose.msra.mxu0 0.0
        %1525 = vmatprep.subr.mxu0 0.0
        %1526 = vmatpush1.xpose.msra.mxu0 0.0
        %1527 = vmatprep.mubr.f32.mxu0 0.0
        %1528 = vmatmul.mubr.f32.gmra.mrb[0].mxu0 %v1459
        %v1529 = vpop.f32.mrb[0].mxu0
        %v1530 = vadd.f32 0.0, %v1529
        %v1531 = vpop.f32.mrb[0].mxu0
        %1532 = vdwg.mxu0
        %v1533 = vmul.f32 %v1530, 0.35355338
        %v1534 = vsel %vm859, %v1533, -inf
        %1535 = vmax.xlane.f32.xlu0 %v1534
        %v1536 = vpop.xlane.xlu0 %1535
        %v1537 = vsub.f32 %v1533, %v1536
        %v1538 = vmul.f32 %v1537, 1.442695
        %v1539 = vpow.pop %v1538
        %v1540 = vsel %vm859, %v1539, 0.0
        %1541 = vadd.xlane.f32.xlu0 %v1540
        %v1542 = vpop.xlane.xlu0 %1541
        %v1543 = vrcp.pop %v1542
        %v1544 = vmul.f32 %v1539, %v1543
        %s1545 = scalar_lea.vmem %s566, 24 [#allocation15]
        %1546 = vst.msk [vmem:[%s1545] sm:$0xff] %vm859, %v1544
        %1547 = vxpose.xlu0.b32.start [1/16] %v1544, 128
        %1548 = vxpose.xlu0.b32.cont [2/16] 0.0, 128
        %1549 = vxpose.xlu0.b32.cont [3/16] 0.0, 128
        %1550 = vxpose.xlu0.b32.cont [4/16] 0.0, 128
        %1551 = vxpose.xlu0.b32.cont [5/16] 0.0, 128
        %1552 = vxpose.xlu0.b32.cont [6/16] 0.0, 128
        %1553 = vxpose.xlu0.b32.cont [7/16] 0.0, 128
        %1554 = vxpose.xlu0.b32.cont [8/16] 0.0, 128
        %1555 = vxpose.xlu0.b32.cont [9/16] 0.0, 128
        %1556 = vxpose.xlu0.b32.cont [10/16] 0.0, 128
        %1557 = vxpose.xlu0.b32.cont [11/16] 0.0, 128
        %1558 = vxpose.xlu0.b32.cont [12/16] 0.0, 128
        %1559 = vxpose.xlu0.b32.cont [13/16] 0.0, 128
        %1560 = vxpose.xlu0.b32.cont [14/16] 0.0, 128
        %1561 = vxpose.xlu0.b32.cont [15/16] 0.0, 128
        %1562 = vxpose.xlu0.b32.end [16/16] 0.0, 128
        %v1563 = vpop.trf.xlu0
        %v1564 = vpop.trf.xlu0
        %v1565 = vpop.trf.xlu0
        %v1566 = vpop.trf.xlu0
        %v1567 = vpop.trf.xlu0
        %v1568 = vpop.trf.xlu0
        %v1569 = vpop.trf.xlu0
        %v1570 = vpop.trf.xlu0
        %v1571 = vpop.trf.xlu0
        %v1572 = vpop.trf.xlu0
        %v1573 = vpop.trf.xlu0
        %v1574 = vpop.trf.xlu0
        %v1575 = vpop.trf.xlu0
        %v1576 = vpop.trf.xlu0
        %v1577 = vpop.trf.xlu0
        %v1578 = vpop.trf.xlu0
        %1579 = vrot.lane.b32.xlu0 %v856, 104
        %v1580 = vpop.permute.xlu0 %1579
        %v1583 = vsel %vm859, %v1563, 0
        %1585 = vmatprep.subr.mxu0 0.0
        %1586 = vmatpush1.msra.mxu0 %v1580
        %1587 = vmatprep.subr.mxu0 0.0
        %1588 = vmatpush1.msra.mxu0 0.0
        %1589 = vmatprep.subr.mxu0 0.0
        %1590 = vmatpush1.msra.mxu0 0.0
        %1591 = vmatprep.subr.mxu0 0.0
        %1592 = vmatpush1.msra.mxu0 0.0
        %1593 = vmatprep.subr.mxu0 0.0
        %1594 = vmatpush1.msra.mxu0 0.0
        %1595 = vmatprep.subr.mxu0 0.0
        %1596 = vmatpush1.msra.mxu0 0.0
        %1597 = vmatprep.subr.mxu0 0.0
        %1598 = vmatpush1.msra.mxu0 0.0
        %1599 = vmatprep.subr.mxu0 0.0
        %1600 = vmatpush1.msra.mxu0 0.0
        %1601 = vmatprep.subr.mxu0 0.0
        %1602 = vmatpush1.msra.mxu0 0.0
        %1603 = vmatprep.subr.mxu0 0.0
        %1604 = vmatpush1.msra.mxu0 0.0
        %1605 = vmatprep.subr.mxu0 0.0
        %1606 = vmatpush1.msra.mxu0 0.0
        %1607 = vmatprep.subr.mxu0 0.0
        %1608 = vmatpush1.msra.mxu0 0.0
        %1609 = vmatprep.subr.mxu0 0.0
        %1610 = vmatpush1.msra.mxu0 0.0
        %1611 = vmatprep.subr.mxu0 0.0
        %1612 = vmatpush1.msra.mxu0 0.0
        %1613 = vmatprep.subr.mxu0 0.0
        %1614 = vmatpush1.msra.mxu0 0.0
        %1615 = vmatprep.subr.mxu0 0.0
        %1616 = vmatpush1.msra.mxu0 0.0
        %1617 = vmatprep.subr.mxu0 0.0
        %1618 = vmatpush1.msra.mxu0 0.0
        %1619 = vmatprep.subr.mxu0 0.0
        %1620 = vmatpush1.msra.mxu0 0.0
        %1621 = vmatprep.subr.mxu0 0.0
        %1622 = vmatpush1.msra.mxu0 0.0
        %1623 = vmatprep.subr.mxu0 0.0
        %1624 = vmatpush1.msra.mxu0 0.0
        %1625 = vmatprep.subr.mxu0 0.0
        %1626 = vmatpush1.msra.mxu0 0.0
        %1627 = vmatprep.subr.mxu0 0.0
        %1628 = vmatpush1.msra.mxu0 0.0
        %1629 = vmatprep.subr.mxu0 0.0
        %1630 = vmatpush1.msra.mxu0 0.0
        %1631 = vmatprep.subr.mxu0 0.0
        %1632 = vmatpush1.msra.mxu0 0.0
        %1633 = vmatprep.subr.mxu0 0.0
        %1634 = vmatpush1.msra.mxu0 0.0
        %1635 = vmatprep.subr.mxu0 0.0
        %1636 = vmatpush1.msra.mxu0 0.0
        %1637 = vmatprep.subr.mxu0 0.0
        %1638 = vmatpush1.msra.mxu0 0.0
        %1639 = vmatprep.subr.mxu0 0.0
        %1640 = vmatpush1.msra.mxu0 0.0
        %1641 = vmatprep.subr.mxu0 0.0
        %1642 = vmatpush1.msra.mxu0 0.0
        %1643 = vmatprep.subr.mxu0 0.0
        %1644 = vmatpush1.msra.mxu0 0.0
        %1645 = vmatprep.subr.mxu0 0.0
        %1646 = vmatpush1.msra.mxu0 0.0
        %1647 = vmatprep.subr.mxu0 0.0
        %1648 = vmatpush1.msra.mxu0 0.0
        %1649 = vmatprep.mubr.f32.mxu0 0.0
        %1650 = vmatmul.mubr.f32.gmra.mrb[0].mxu0 %v1583
        %v1651 = vpop.f32.mrb[0].mxu0
        %v1652 = vadd.f32 0.0, %v1651
        %v1653 = vpop.f32.mrb[0].mxu0
        %1654 = vdwg.mxu0
        %1656 = vrot.lane.b32.xlu0 %v1252, 8
        %v1657 = vpop.permute.xlu0 %1656
        %1660 = vrot.lane.b32.xlu0 %v1452, 16
        %v1661 = vpop.permute.xlu0 %1660
        %1664 = vrot.lane.b32.xlu0 %v1652, 24
        %v1665 = vpop.permute.xlu0 %1664
        %v1667 = vsel %vm859, %v1051, %v1657
        %vm1668 = vcmask 130048
        %v1669 = vsel %vm1668, %v1667, %v1661
        %vm1670 = vcmask 195584
        %v1671 = vsel %vm1670, %v1669, %v1665
        %v1672 = vld [vmem:[%s9] sm:$0xff]
        %v1673 = vld [vmem:[%s9 + $0x8] sm:$0xff]
        %v1674 = vld [vmem:[%s9 + $0x10] sm:$0xff]
        %v1675 = vld [vmem:[%s9 + $0x18] sm:$0xff]
        %v1676 = vld [vmem:[%s10] sm:$0x1]
        %v1678 = vlaneseq
        %v1679 = vshrl.u32 %v1678, 7
        %v1680 = vsub.s32 0, %v1679
        %v1681 = vrot.slane %v1676, %v1680
        %v1684 = vsel %vm581, %v1671, 0
        %v1687 = vsel %vm581, %v1672, 0
        %v1690 = vsel %vm581, %v1673, 0
        %v1693 = vsel %vm581, %v1674, 0
        %v1696 = vsel %vm581, %v1675, 0
        %1698 = vmatprep.subr.mxu0 0.0
        %1699 = vmatpush1.xpose.msra.mxu0 %v1687
        %1700 = vmatprep.subr.mxu0 0.0
        %1701 = vmatpush1.xpose.msra.mxu0 %v1690
        %1702 = vmatprep.subr.mxu0 0.0
        %1703 = vmatpush1.xpose.msra.mxu0 %v1693
        %1704 = vmatprep.subr.mxu0 0.0
        %1705 = vmatpush1.xpose.msra.mxu0 %v1696
        %1706 = vmatprep.subr.mxu0 0.0
        %1707 = vmatpush1.xpose.msra.mxu0 0.0
        %1708 = vmatprep.subr.mxu0 0.0
        %1709 = vmatpush1.xpose.msra.mxu0 0.0
        %1710 = vmatprep.subr.mxu0 0.0
        %1711 = vmatpush1.xpose.msra.mxu0 0.0
        %1712 = vmatprep.subr.mxu0 0.0
        %1713 = vmatpush1.xpose.msra.mxu0 0.0
        %1714 = vmatprep.subr.mxu0 0.0
        %1715 = vmatpush1.xpose.msra.mxu0 0.0
        %1716 = vmatprep.subr.mxu0 0.0
        %1717 = vmatpush1.xpose.msra.mxu0 0.0
        %1718 = vmatprep.subr.mxu0 0.0
        %1719 = vmatpush1.xpose.msra.mxu0 0.0
        %1720 = vmatprep.subr.mxu0 0.0
        %1721 = vmatpush1.xpose.msra.mxu0 0.0
        %1722 = vmatprep.subr.mxu0 0.0
        %1723 = vmatpush1.xpose.msra.mxu0 0.0
        %1724 = vmatprep.subr.mxu0 0.0
        %1725 = vmatpush1.xpose.msra.mxu0 0.0
        %1726 = vmatprep.subr.mxu0 0.0
        %1727 = vmatpush1.xpose.msra.mxu0 0.0
        %1728 = vmatprep.subr.mxu0 0.0
        %1729 = vmatpush1.xpose.msra.mxu0 0.0
        %1730 = vmatprep.subr.mxu0 0.0
        %1731 = vmatpush1.xpose.msra.mxu0 0.0
        %1732 = vmatprep.subr.mxu0 0.0
        %1733 = vmatpush1.xpose.msra.mxu0 0.0
        %1734 = vmatprep.subr.mxu0 0.0
        %1735 = vmatpush1.xpose.msra.mxu0 0.0
        %1736 = vmatprep.subr.mxu0 0.0
        %1737 = vmatpush1.xpose.msra.mxu0 0.0
        %1738 = vmatprep.subr.mxu0 0.0
        %1739 = vmatpush1.xpose.msra.mxu0 0.0
        %1740 = vmatprep.subr.mxu0 0.0
        %1741 = vmatpush1.xpose.msra.mxu0 0.0
        %1742 = vmatprep.subr.mxu0 0.0
        %1743 = vmatpush1.xpose.msra.mxu0 0.0
        %1744 = vmatprep.subr.mxu0 0.0
        %1745 = vmatpush1.xpose.msra.mxu0 0.0
        %1746 = vmatprep.subr.mxu0 0.0
        %1747 = vmatpush1.xpose.msra.mxu0 0.0
        %1748 = vmatprep.subr.mxu0 0.0
        %1749 = vmatpush1.xpose.msra.mxu0 0.0
        %1750 = vmatprep.subr.mxu0 0.0
        %1751 = vmatpush1.xpose.msra.mxu0 0.0
        %1752 = vmatprep.subr.mxu0 0.0
        %1753 = vmatpush1.xpose.msra.mxu0 0.0
        %1754 = vmatprep.subr.mxu0 0.0
        %1755 = vmatpush1.xpose.msra.mxu0 0.0
        %1756 = vmatprep.subr.mxu0 0.0
        %1757 = vmatpush1.xpose.msra.mxu0 0.0
        %1758 = vmatprep.subr.mxu0 0.0
        %1759 = vmatpush1.xpose.msra.mxu0 0.0
        %1760 = vmatprep.subr.mxu0 0.0
        %1761 = vmatpush1.xpose.msra.mxu0 0.0
        %1762 = vmatprep.mubr.f32.mxu0 0.0
        %1763 = vmatmul.mubr.f32.gmra.mrb[0].mxu0 %v1684
        %v1764 = vpop.f32.mrb[0].mxu0
        %v1765 = vadd.f32 %v1681, %v1764
        %v1766 = vpop.f32.mrb[0].mxu0
        %1767 = vdwg.mxu0
        %1768 = vst.msk [vmem:[%s559] sm:$0xff] %vm581, %v1765
        %s1769 = sand.u32 %s292, 1
        %s1770 = scalar_lea.sflag [#allocation4], %s1769
        %s1771 = sand.u32 %s292, 1
        %s1772 = smul.addr %s1771, 8
        %s1773 = scalar_lea.vmem [#allocation14], %s1772
        %s1774 = sand.u32 %s318, 1
        %s1775 = scalar_lea.sflag [#allocation16], %s1774
        %s1776 = sand.u32 %s318, 1
        %s1777 = smul.addr %s1776, 32
        %s1778 = scalar_lea.vmem [#allocation15], %s1777
        // Predicated region
        $region93: #{tpu_custom_call.1} parent=63 // pred_check
          %p1779 = pneg %p302
        $region94: #{tpu_custom_call.1} parent=63 // pred_check_branch
          %1781 = sbr.rel (%p1779) target = $region96
        $region95: #{tpu_custom_call.1} parent=63 // pred_region
          %s1783 = ssub.s32 128, 128
          %1784 = vsyncadd %s1770, %s1783
          %s1785 = smul.addr %s38, 128
          %s1786 = scalar_lea.hbm %s11, %s1785
          %s1788 = sshll.u32 %s1773, 4
          %s1789 = int_to_ptr.vmem [resolvable:$true] %s1788
          %1791 = dma.vmem_to_hbm [thread:$0]  %s1789, 128, %s1786, %s1770
        $region96: #{tpu_custom_call.1} parent=63 // pred_fallthru
          _
        // Predicated region
        $region97: #{tpu_custom_call.1} parent=63 // pred_check
          %p1792 = pneg %p328
        $region98: #{tpu_custom_call.1} parent=63 // pred_check_branch
          %1794 = sbr.rel (%p1792) target = $region100
        $region99: #{tpu_custom_call.1} parent=63 // pred_region
          %s1796 = ssub.s32 512, 512
          %1797 = vsyncadd %s1775, %s1796
          %s1798 = smul.addr %s38, 4
          %s1799 = smul.addr %s1798, 128
          %s1800 = scalar_lea.hbm %s12, %s1799
          %s1801 = sshll.u32 %s1778, 4
          %s1802 = int_to_ptr.vmem [resolvable:$true] %s1801
          %1807 = dma.vmem_to_hbm [thread:$0]  %s1802, 512, %s1800, %s1775, 128, 128, 8
        $region100: #{tpu_custom_call.1} parent=63 // pred_fallthru
          _
      $region64: #{tpu_custom_call.1} parent=5 // pred_fallthru
        _
      %p1808 = scmp.le.s32.totalorder 2, %s33
      // Predicated region
      $region101: #{tpu_custom_call.1} parent=5 // pred_check
        %p1809 = pneg %p1808
      $region102: #{tpu_custom_call.1} parent=5 // pred_check_branch
        %1811 = sbr.rel (%p1809) target = $region104
      $region103: #{tpu_custom_call.1} parent=5 // pred_region
        %s1812 = ssub.s32 %s33, 2
        // Predicated region
        $region105: #{tpu_custom_call.1} parent=103 // pred_check
          %p1813 = pneg %p308
        $region106: #{tpu_custom_call.1} parent=103 // pred_check_branch
          %1815 = sbr.rel (%p1813) target = $region108
        $region107: #{tpu_custom_call.1} parent=103 // pred_region
          %s1816 = sand.u32 %s293, 1
          %s1817 = scalar_lea.sflag [#allocation4], %s1816
          %s1818 = sand.u32 %s293, 1
          %s1819 = smul.addr %s1818, 8
          %s1820 = scalar_lea.vmem [#allocation14], %s1819
          %1821 = dma.done %s1817, 128
        $region108: #{tpu_custom_call.1} parent=103 // pred_fallthru
          _
        // Predicated region
        $region109: #{tpu_custom_call.1} parent=103 // pred_check
          %p1822 = pneg %p334
        $region110: #{tpu_custom_call.1} parent=103 // pred_check_branch
          %1824 = sbr.rel (%p1822) target = $region112
        $region111: #{tpu_custom_call.1} parent=103 // pred_region
          %s1825 = sand.u32 %s319, 1
          %s1826 = scalar_lea.sflag [#allocation16], %s1825
          %s1827 = sand.u32 %s319, 1
          %s1828 = smul.addr %s1827, 32
          %s1829 = scalar_lea.vmem [#allocation15], %s1828
          %1830 = dma.done %s1826, 512
        $region112: #{tpu_custom_call.1} parent=103 // pred_fallthru
          _
      $region104: #{tpu_custom_call.1} parent=5 // pred_fallthru
        _
    $region6: #{tpu_custom_call.1} parent=1 // loop_footer
      %s37 = sadd.s32 1, %s33
    $region7: #{tpu_custom_call.1} parent=1 // loop_footer_branch
      %32 = sbr.rel target = $region3
    $region8: #{tpu_custom_call.1} parent=1 // loop_exit
      _
    %1831 = vsyncpa [#allocation3], 1
    %s1832 = scalar_lea.sflag [#allocation3], 1
    %1833 = vsyncpa %s1832, 1
    %1834 = vsyncpa [#allocation6], 1
    %s1835 = scalar_lea.sflag [#allocation6], 1
    %1836 = vsyncpa %s1835, 1
    %1837 = vsyncpa [#allocation9], 1
    %1838 = vsyncpa [#allocation12], 1
    %1839 = vsyncpa [#allocation4], 1
    %s1840 = scalar_lea.sflag [#allocation4], 1
    %1841 = vsyncpa %s1840, 1
    %1842 = vsyncpa [#allocation16], 1
    %s1843 = scalar_lea.sflag [#allocation16], 1
    %1844 = vsyncpa %s1843, 1

</llo_original>
